<compile_context>
chip_gen: v6e
topology: v6e:2x2x1
jax: 0.10.0
libtpu: 0.0.40
codegen_flags: <defaults>
</compile_context>

<pallas_src>
import functools
import numpy as np
import jax
import jax.numpy as jnp
from jax import lax
from jax.experimental import pallas as pl
from jax.experimental.pallas import tpu as pltpu

EPS = 1e-5


# ----------------------------- Pallas kernel ------------------------------ #
def respath_fused_kernel(x_ref, mask_ref, wc_ref, tc_ref, st_ref, tb_ref,
                         o_ref, patches_ref, *, W, n_layers):
    """All Respath layers fused; activation kept in (C, B_tile*H*W) layout.

    x_ref      : (c_pad, LW)          input slab, LW = B_tile*H*W lanes
    mask_ref   : (8, LW)              border-validity masks for the 8 off-center taps
    wc_ref     : (L, 2*Cout, 9*c_pad) bf16 combined conv weights (BN + sb folded):
                                      rows [:Cout]  = sb^2 * BN3-folded 3x3 conv,
                                      rows [Cout:]  = sb   * BN1-folded 1x1 shortcut
                                                      (center-tap columns, zeros elsewhere)
    tc_ref     : (L, 2*Cout, 1)       matching per-channel shifts
    st_ref     : (L, Cout, 1)         sb * tb  (standalone-BN shift, pre-scaled)
    tb_ref     : (L, Cout, 1)         tb       (standalone-BN shift)
    o_ref      : (Cout, LW)
    patches_ref: (9*c_pad, LW) f32    persistent im2col scratch
    """
    c_pad, LW = x_ref.shape
    two_cout = wc_ref.shape[1]
    cout = two_cout // 2

    # Tap table: (lane shift, mask row) per 3x3 tap, in (kh, kw) order.
    # result[p] = x[p + dy*W + dx]; wraps across images only at masked lanes.
    taps = []
    mrow = 0
    for dy in (-1, 0, 1):
        for dx in (-1, 0, 1):
            if dy == 0 and dx == 0:
                taps.append((0, None))                 # center tap, all valid
            else:
                taps.append(((-(dy * W + dx)) % LW, mrow))
                mrow += 1

    masks = mask_ref[...]                              # (8, LW), loaded once
    x = x_ref[...].astype(jnp.float32)                 # (c_pad, LW)

    for l in range(n_layers):                          # respath_length is small -> unrolled
        # --- im2col: 9 lane-rotated, border-masked taps into the VMEM scratch
        for t, (shift, mr) in enumerate(taps):
            sh = x if shift == 0 else pltpu.roll(x, shift, 1)   # XLU rotation
            if mr is not None:
                sh = sh * masks[mr:mr + 1, :]
            patches_ref[t * c_pad:(t + 1) * c_pad, :] = sh      # tile-aligned store

        # --- one MXU push per layer: 3x3 conv rows + 1x1 shortcut rows, bf16 in, f32 acc
        z = jnp.dot(wc_ref[l],
                    patches_ref[...].astype(jnp.bfloat16),
                    preferred_element_type=jnp.float32) + tc_ref[l]

        # --- epilogue: sb folded into the weights, so only adds + ReLUs remain
        #   z[:cout]  = sb^2 * BN3(conv3 x)      z[cout:] = sb * BN1(conv1 x)
        #   y = relu(relu(relu(z3) + sb*tb) + z1 + tb)
        #     = relu(BNb(relu(BNb(relu(BN3(conv3 x)))) + BN1(conv1 x)))
        y = jnp.maximum(z[:cout], 0.0)
        y = jnp.maximum(y + st_ref[l], 0.0)
        y = jnp.maximum(y + z[cout:] + tb_ref[l], 0.0)

        if l < n_layers - 1 and cout < c_pad:          # keep the buffer shape fixed
            y = jnp.concatenate(
                [y, jnp.zeros((c_pad - cout, LW), jnp.float32)], axis=0)
        x = y

    o_ref[...] = x.astype(o_ref.dtype)                 # lane-dense (Cout, LW) store


# ------------------------------- wrapper ----------------------------------- #
def _build_masks(H, W, b_tile):
    """(8, b_tile*H*W) {0,1} masks for the 8 off-center 3x3 taps (host-side)."""
    HW = H * W
    col = np.arange(b_tile * HW)
    hpos = (col % HW) // W          # per-image row (batch-stacked lane axis)
    wpos = col % W
    rows = []
    for dy in (-1, 0, 1):
        for dx in (-1, 0, 1):
            if dy == 0 and dx == 0:
                continue
            valid = ((hpos + dy >= 0) & (hpos + dy < H) &
                     (wpos + dx >= 0) & (wpos + dx < W))
            rows.append(valid.astype(np.float32))
    return jnp.asarray(np.stack(rows))


def respath_forward(x_nchw, params, *, lane_target=2048):
    """x_nchw: (N, Cin, H, W) float32. params: dict from fold_params()."""
    wc, tc, st, tb = params["wc"], params["tc"], params["st"], params["tb"]
    N, c_in, H, W = x_nchw.shape
    HW = H * W
    L, two_cout, nine_cpad = wc.shape
    cout = two_cout // 2
    c_pad = nine_cpad // 9

    # Stack B_tile batch elements along the lane axis per grid step.
    b_tile = min(N, max(1, lane_target // HW))
    G = -(-N // b_tile)
    n_pad = G * b_tile
    LW = b_tile * HW

    x = x_nchw.reshape(N, c_in, HW).astype(jnp.float32)
    x = jnp.pad(x, ((0, n_pad - N), (0, c_pad - c_in), (0, 0)))
    # (G, B_tile, c_pad, HW) -> (G, c_pad, B_tile*HW); lanes = [b_local, h, w].
    x = x.reshape(G, b_tile, c_pad, HW).transpose(0, 2, 1, 3).reshape(G, c_pad, LW)

    masks = _build_masks(H, W, b_tile)

    kernel = functools.partial(respath_fused_kernel, W=W, n_layers=L)
    const = lambda shp: pl.BlockSpec(tuple(shp), lambda g: (0,) * len(shp))
    out = pl.pallas_call(
        kernel,
        out_shape=jax.ShapeDtypeStruct((G, cout, LW), jnp.float32),
        grid_spec=pltpu.PrefetchScalarGridSpec(
            num_scalar_prefetch=0,
            grid=(G,),                                 # one batch-tile per step
            in_specs=[
                pl.BlockSpec((None, c_pad, LW), lambda g: (g, 0, 0)),
                const(masks.shape), const(wc.shape), const(tc.shape),
                const(st.shape), const(tb.shape),
            ],
            out_specs=pl.BlockSpec((None, cout, LW), lambda g: (g, 0, 0)),
            scratch_shapes=[pltpu.VMEM((9 * c_pad, LW), jnp.float32)],
        ),
        compiler_params=pltpu.CompilerParams(
            dimension_semantics=("parallel",),
            vmem_limit_bytes=32 * 1024 * 1024),
    )(x, masks, wc, tc, st, tb)

    out = out.reshape(G, cout, b_tile, HW).transpose(0, 2, 1, 3)
    return out.reshape(n_pad, cout, H, W)[:N]


# ------------------------ parameter setup (glue) --------------------------- #
def fold_bn(gamma, beta, mean, var, bias):
    scale = gamma / jnp.sqrt(var + EPS)
    shift = beta + scale * (bias - mean)
    return scale, shift


def _round8(n):
    return -(-n // 8) * 8


def init_raw_params(key, num_in, num_out, length):
    """Deterministic synthetic weights (PyTorch-equivalent parameterization)."""
    raw = []
    for i in range(length):
        c_in = num_in if i == 0 else num_out
        key, *ks = jax.random.split(key, 17)
        nrm = lambda k, s, sc: sc * jax.random.normal(k, s, jnp.float32)
        raw.append(dict(
            w1=nrm(ks[0], (1, 1, c_in, num_out), 1.0 / np.sqrt(c_in)),
            b1=nrm(ks[1], (num_out,), 0.1),
            g1=1.0 + nrm(ks[2], (num_out,), 0.1),
            be1=nrm(ks[3], (num_out,), 0.1),
            m1=nrm(ks[4], (num_out,), 0.1),
            v1=1.0 + jax.random.uniform(ks[5], (num_out,), jnp.float32),
            w3=nrm(ks[6], (3, 3, c_in, num_out), 1.0 / np.sqrt(9 * c_in)),
            b3=nrm(ks[7], (num_out,), 0.1),
            g3=1.0 + nrm(ks[8], (num_out,), 0.1),
            be3=nrm(ks[9], (num_out,), 0.1),
            m3=nrm(ks[10], (num_out,), 0.1),
            v3=1.0 + jax.random.uniform(ks[11], (num_out,), jnp.float32),
            gb=1.0 + nrm(ks[12], (num_out,), 0.1),
            beb=nrm(ks[13], (num_out,), 0.1),
            mb=nrm(ks[14], (num_out,), 0.1),
            vb=1.0 + jax.random.uniform(ks[15], (num_out,), jnp.float32),
        ))
    return raw


def fold_params(raw, num_in, num_out):
    """Host-side folding: BN scales (including the standalone BN, requires
    sb>0) into conv weights, 3x3 + 1x1 combined into one (2*Cout, 9*C_pad)
    bf16 matrix per layer (shortcut in the center-tap columns), input channels
    padded to a sublane-aligned C_pad."""
    c_pad = max(_round8(num_in), _round8(num_out))
    cout = num_out
    wc_l, tc_l, st_l, tb_l = [], [], [], []
    for i, p in enumerate(raw):
        c_in = num_in if i == 0 else num_out
        s1, t1 = fold_bn(p["g1"], p["be1"], p["m1"], p["v1"], p["b1"])
        s3, t3 = fold_bn(p["g3"], p["be3"], p["m3"], p["v3"], p["b3"])
        sb, tb = fold_bn(p["gb"], p["beb"], p["mb"], p["vb"],
                         jnp.zeros((num_out,), jnp.float32))
        s1n, t1n = np.asarray(s1), np.asarray(t1)
        s3n, t3n = np.asarray(s3), np.asarray(t3)
        sbn, tbn = np.asarray(sb), np.asarray(tb)
        # Folding sb through the ReLUs is only valid for sb > 0 elementwise.
        assert np.all(sbn > 0), "standalone-BN scale must be > 0 to fold through ReLU"
        w3 = np.asarray(p["w3"])                           # (3,3,c_in,cout) HWIO
        w1 = np.asarray(p["w1"]).reshape(c_in, cout)
        wc = np.zeros((2 * cout, 9 * c_pad), np.float32)
        for kh in range(3):
            for kw in range(3):
                t = kh * 3 + kw
                wc[:cout, t * c_pad:t * c_pad + c_in] = (
                    w3[kh, kw].T * (sbn * sbn * s3n)[:, None])
        wc[cout:, 4 * c_pad:4 * c_pad + c_in] = w1.T * (sbn * s1n)[:, None]
        wc_l.append(wc)
        tc_l.append(np.concatenate([sbn * sbn * t3n, sbn * t1n])[:, None])
        st_l.append((sbn * tbn)[:, None])
        tb_l.append(tbn[:, None])
    return dict(
        wc=jnp.asarray(np.stack(wc_l), jnp.bfloat16),      # bf16 MXU operand
        tc=jnp.asarray(np.stack(tc_l), jnp.float32),
        st=jnp.asarray(np.stack(st_l), jnp.float32),
        tb=jnp.asarray(np.stack(tb_l), jnp.float32),
    )


# ----------------------- pure-JAX reference (check) ------------------------ #
def _bn(x, g, b, m, v):
    return g * (x - m) / jnp.sqrt(v + EPS) + b


def _conv_same(x, w, b):  # x NHWC, w HWIO
    return lax.conv_general_dilated(
        x, w, (1, 1), "SAME",
        dimension_numbers=("NHWC", "HWIO", "NHWC")) + b


def respath_reference(x_nchw, raw_params):
    x = jnp.transpose(x_nchw, (0, 2, 3, 1)).astype(jnp.float32)
    for p in raw_params:
        shortcut = _bn(_conv_same(x, p["w1"], p["b1"]),
                       p["g1"], p["be1"], p["m1"], p["v1"])
        y = jnp.maximum(_bn(_conv_same(x, p["w3"], p["b3"]),
                            p["g3"], p["be3"], p["m3"], p["v3"]), 0.0)
        y = jnp.maximum(_bn(y, p["gb"], p["beb"], p["mb"], p["vb"]), 0.0)
        y = y + shortcut
        y = jnp.maximum(_bn(y, p["gb"], p["beb"], p["mb"], p["vb"]), 0.0)
        x = y
    return jnp.transpose(x, (0, 3, 1, 2))


# --------------------------------- main ------------------------------------ #
if __name__ == "__main__":
    N, C_IN, C_OUT, H, W = 2, 4, 8, 16, 16
    RESPATH_LENGTH = 2

    key = jax.random.PRNGKey(0)
    key, xkey = jax.random.split(key)
    x = jax.random.normal(xkey, (N, C_IN, H, W), jnp.float32)   # NCHW like PyTorch

    raw_params = init_raw_params(key, C_IN, C_OUT, RESPATH_LENGTH)
    fused_params = fold_params(raw_params, C_IN, C_OUT)

    out = jax.block_until_ready(respath_forward(x, fused_params))
    ref = jax.block_until_ready(respath_reference(x, raw_params))

    assert out.shape == (N, C_OUT, H, W), out.shape
    max_err = float(jnp.max(jnp.abs(out - ref)))
    ref_scale = float(jnp.max(jnp.abs(ref)))
    tol = 2e-2 * max(ref_scale, 1.0)          # bf16 matmul operands, f32 accumulate
    assert max_err < tol, f"mismatch vs reference: {max_err} (tol {tol})"

    print("KERNEL_OK")
</pallas_src>

<mosaic_0001>
module attributes {stable_mosaic.version = 11 : i64} {
  func.func @respath_fused_kernel(%arg0: i32, %arg1: memref<1x8x512xf32, #tpu.memory_space<vmem>>, %arg2: memref<8x512xf32, #tpu.memory_space<vmem>>, %arg3: memref<2x16x72xbf16, #tpu.memory_space<vmem>>, %arg4: memref<2x16x1xf32, #tpu.memory_space<vmem>>, %arg5: memref<2x8x1xf32, #tpu.memory_space<vmem>>, %arg6: memref<2x8x1xf32, #tpu.memory_space<vmem>>, %arg7: memref<1x8x512xf32, #tpu.memory_space<vmem>>, %arg8: memref<72x512xf32, #tpu.memory_space<vmem>>) attributes {dimension_semantics = [#tpu.dimension_semantics<parallel>], iteration_bounds = array<i64: 1>, scalar_prefetch = 0 : i64, scratch_operands = 1 : i64, tpu.core_type = #tpu.core_type<tc>, window_params = [{transform_indices = @transform_0, window_bounds = array<i64: 1, 8, 512>}, {pipeline_mode = #tpu.pipeline_mode<synchronous>, transform_indices = @transform_1, window_bounds = array<i64: 8, 512>}, {pipeline_mode = #tpu.pipeline_mode<synchronous>, transform_indices = @transform_2, window_bounds = array<i64: 2, 16, 72>}, {pipeline_mode = #tpu.pipeline_mode<synchronous>, transform_indices = @transform_3, window_bounds = array<i64: 2, 16, 1>}, {pipeline_mode = #tpu.pipeline_mode<synchronous>, transform_indices = @transform_4, window_bounds = array<i64: 2, 8, 1>}, {pipeline_mode = #tpu.pipeline_mode<synchronous>, transform_indices = @transform_5, window_bounds = array<i64: 2, 8, 1>}, {transform_indices = @transform_6, window_bounds = array<i64: 1, 8, 512>}]} {
    %c0 = arith.constant 0 : index
    %c0_0 = arith.constant 0 : index
    %0 = vector.load %arg2[%c0, %c0_0] : memref<8x512xf32, #tpu.memory_space<vmem>>, vector<8x512xf32>
    %c0_1 = arith.constant 0 : index
    %c0_2 = arith.constant 0 : index
    %c0_3 = arith.constant 0 : index
    %1 = vector.load %arg1[%c0_1, %c0_2, %c0_3] : memref<1x8x512xf32, #tpu.memory_space<vmem>>, vector<1x8x512xf32>
    %2 = vector.shape_cast %1 : vector<1x8x512xf32> to vector<8x512xf32>
    %c17_i32 = arith.constant 17 : i32
    %3 = tpu.dynamic_rotate %2 by %c17_i32 dim 1 : vector<8x512xf32>, i32 -> vector<8x512xf32>
    %4 = vector.extract_strided_slice %0 {offsets = [0, 0], sizes = [1, 512], strides = [1, 1]} : vector<8x512xf32> to vector<1x512xf32>
    %5 = vector.broadcast %4 : vector<1x512xf32> to vector<8x512xf32>
    %6 = arith.mulf %3, %5 : vector<8x512xf32>
    %c0_4 = arith.constant 0 : index
    %c0_5 = arith.constant 0 : index
    %7 = vector.load %arg8[%c0_4, %c0_5] : memref<72x512xf32, #tpu.memory_space<vmem>>, vector<8x512xf32>
    tpu.vector_store %arg8[%c0_4, %c0_5], %6 {strides = array<i32>} : memref<72x512xf32, #tpu.memory_space<vmem>>, vector<8x512xf32>,
    %c16_i32 = arith.constant 16 : i32
    %8 = tpu.dynamic_rotate %2 by %c16_i32 dim 1 : vector<8x512xf32>, i32 -> vector<8x512xf32>
    %9 = vector.extract_strided_slice %0 {offsets = [1, 0], sizes = [1, 512], strides = [1, 1]} : vector<8x512xf32> to vector<1x512xf32>
    %10 = vector.broadcast %9 : vector<1x512xf32> to vector<8x512xf32>
    %11 = arith.mulf %8, %10 : vector<8x512xf32>
    %c8 = arith.constant 8 : index
    %c0_6 = arith.constant 0 : index
    %12 = vector.load %arg8[%c8, %c0_6] : memref<72x512xf32, #tpu.memory_space<vmem>>, vector<8x512xf32>
    tpu.vector_store %arg8[%c8, %c0_6], %11 {strides = array<i32>} : memref<72x512xf32, #tpu.memory_space<vmem>>, vector<8x512xf32>,
    %c15_i32 = arith.constant 15 : i32
    %13 = tpu.dynamic_rotate %2 by %c15_i32 dim 1 : vector<8x512xf32>, i32 -> vector<8x512xf32>
    %14 = vector.extract_strided_slice %0 {offsets = [2, 0], sizes = [1, 512], strides = [1, 1]} : vector<8x512xf32> to vector<1x512xf32>
    %15 = vector.broadcast %14 : vector<1x512xf32> to vector<8x512xf32>
    %16 = arith.mulf %13, %15 : vector<8x512xf32>
    %c16 = arith.constant 16 : index
    %c0_7 = arith.constant 0 : index
    %17 = vector.load %arg8[%c16, %c0_7] : memref<72x512xf32, #tpu.memory_space<vmem>>, vector<8x512xf32>
    tpu.vector_store %arg8[%c16, %c0_7], %16 {strides = array<i32>} : memref<72x512xf32, #tpu.memory_space<vmem>>, vector<8x512xf32>,
    %c1_i32 = arith.constant 1 : i32
    %18 = tpu.dynamic_rotate %2 by %c1_i32 dim 1 : vector<8x512xf32>, i32 -> vector<8x512xf32>
    %19 = vector.extract_strided_slice %0 {offsets = [3, 0], sizes = [1, 512], strides = [1, 1]} : vector<8x512xf32> to vector<1x512xf32>
    %20 = vector.broadcast %19 : vector<1x512xf32> to vector<8x512xf32>
    %21 = arith.mulf %18, %20 : vector<8x512xf32>
    %c24 = arith.constant 24 : index
    %c0_8 = arith.constant 0 : index
    %22 = vector.load %arg8[%c24, %c0_8] : memref<72x512xf32, #tpu.memory_space<vmem>>, vector<8x512xf32>
    tpu.vector_store %arg8[%c24, %c0_8], %21 {strides = array<i32>} : memref<72x512xf32, #tpu.memory_space<vmem>>, vector<8x512xf32>,
    %c32 = arith.constant 32 : index
    %c0_9 = arith.constant 0 : index
    %23 = vector.load %arg8[%c32, %c0_9] : memref<72x512xf32, #tpu.memory_space<vmem>>, vector<8x512xf32>
    tpu.vector_store %arg8[%c32, %c0_9], %2 {strides = array<i32>} : memref<72x512xf32, #tpu.memory_space<vmem>>, vector<8x512xf32>,
    %c511_i32 = arith.constant 511 : i32
    %24 = tpu.dynamic_rotate %2 by %c511_i32 dim 1 : vector<8x512xf32>, i32 -> vector<8x512xf32>
    %25 = vector.extract_strided_slice %0 {offsets = [4, 0], sizes = [1, 512], strides = [1, 1]} : vector<8x512xf32> to vector<1x512xf32>
    %26 = vector.broadcast %25 : vector<1x512xf32> to vector<8x512xf32>
    %27 = arith.mulf %24, %26 : vector<8x512xf32>
    %c40 = arith.constant 40 : index
    %c0_10 = arith.constant 0 : index
    %28 = vector.load %arg8[%c40, %c0_10] : memref<72x512xf32, #tpu.memory_space<vmem>>, vector<8x512xf32>
    tpu.vector_store %arg8[%c40, %c0_10], %27 {strides = array<i32>} : memref<72x512xf32, #tpu.memory_space<vmem>>, vector<8x512xf32>,
    %c497_i32 = arith.constant 497 : i32
    %29 = tpu.dynamic_rotate %2 by %c497_i32 dim 1 : vector<8x512xf32>, i32 -> vector<8x512xf32>
    %30 = vector.extract_strided_slice %0 {offsets = [5, 0], sizes = [1, 512], strides = [1, 1]} : vector<8x512xf32> to vector<1x512xf32>
    %31 = vector.broadcast %30 : vector<1x512xf32> to vector<8x512xf32>
    %32 = arith.mulf %29, %31 : vector<8x512xf32>
    %c48 = arith.constant 48 : index
    %c0_11 = arith.constant 0 : index
    %33 = vector.load %arg8[%c48, %c0_11] : memref<72x512xf32, #tpu.memory_space<vmem>>, vector<8x512xf32>
    tpu.vector_store %arg8[%c48, %c0_11], %32 {strides = array<i32>} : memref<72x512xf32, #tpu.memory_space<vmem>>, vector<8x512xf32>,
    %c496_i32 = arith.constant 496 : i32
    %34 = tpu.dynamic_rotate %2 by %c496_i32 dim 1 : vector<8x512xf32>, i32 -> vector<8x512xf32>
    %35 = vector.extract_strided_slice %0 {offsets = [6, 0], sizes = [1, 512], strides = [1, 1]} : vector<8x512xf32> to vector<1x512xf32>
    %36 = vector.broadcast %35 : vector<1x512xf32> to vector<8x512xf32>
    %37 = arith.mulf %34, %36 : vector<8x512xf32>
    %c56 = arith.constant 56 : index
    %c0_12 = arith.constant 0 : index
    %38 = vector.load %arg8[%c56, %c0_12] : memref<72x512xf32, #tpu.memory_space<vmem>>, vector<8x512xf32>
    tpu.vector_store %arg8[%c56, %c0_12], %37 {strides = array<i32>} : memref<72x512xf32, #tpu.memory_space<vmem>>, vector<8x512xf32>,
    %c495_i32 = arith.constant 495 : i32
    %39 = tpu.dynamic_rotate %2 by %c495_i32 dim 1 : vector<8x512xf32>, i32 -> vector<8x512xf32>
    %40 = vector.extract_strided_slice %0 {offsets = [7, 0], sizes = [1, 512], strides = [1, 1]} : vector<8x512xf32> to vector<1x512xf32>
    %41 = vector.broadcast %40 : vector<1x512xf32> to vector<8x512xf32>
    %42 = arith.mulf %39, %41 : vector<8x512xf32>
    %c64 = arith.constant 64 : index
    %c0_13 = arith.constant 0 : index
    %43 = vector.load %arg8[%c64, %c0_13] : memref<72x512xf32, #tpu.memory_space<vmem>>, vector<8x512xf32>
    tpu.vector_store %arg8[%c64, %c0_13], %42 {strides = array<i32>} : memref<72x512xf32, #tpu.memory_space<vmem>>, vector<8x512xf32>,
    %c0_14 = arith.constant 0 : index
    %c0_15 = arith.constant 0 : index
    %c0_16 = arith.constant 0 : index
    %44 = vector.load %arg3[%c0_14, %c0_15, %c0_16] : memref<2x16x72xbf16, #tpu.memory_space<vmem>>, vector<1x16x72xbf16>
    %45 = vector.shape_cast %44 : vector<1x16x72xbf16> to vector<16x72xbf16>
    %c0_17 = arith.constant 0 : index
    %c0_18 = arith.constant 0 : index
    %46 = vector.load %arg8[%c0_17, %c0_18] : memref<72x512xf32, #tpu.memory_space<vmem>>, vector<72x512xf32>
    %47 = arith.truncf %46 : vector<72x512xf32> to vector<72x512xbf16>
    %cst = arith.constant dense<0.000000e+00> : vector<16x512xf32>
    %48 = tpu.matmul %45, %47, %cst {dimension_numbers = #tpu.dot_dimension_numbers<[1], [0], [0], [1], [0, 0, 1, 1], [], []>} : vector<16x72xbf16>, vector<72x512xbf16>, vector<16x512xf32> -> vector<16x512xf32>
    %c0_19 = arith.constant 0 : index
    %c0_20 = arith.constant 0 : index
    %c0_21 = arith.constant 0 : index
    %49 = vector.load %arg4[%c0_19, %c0_20, %c0_21] : memref<2x16x1xf32, #tpu.memory_space<vmem>>, vector<1x16x1xf32>
    %50 = vector.shape_cast %49 : vector<1x16x1xf32> to vector<16x1xf32>
    %51 = vector.broadcast %50 : vector<16x1xf32> to vector<16x512xf32>
    %52 = arith.addf %48, %51 : vector<16x512xf32>
    %53 = vector.extract_strided_slice %52 {offsets = [0, 0], sizes = [8, 512], strides = [1, 1]} : vector<16x512xf32> to vector<8x512xf32>
    %cst_22 = arith.constant 0.000000e+00 : f32
    %54 = vector.broadcast %cst_22 : f32 to vector<8x512xf32>
    %55 = arith.maximumf %53, %54 : vector<8x512xf32>
    %c0_23 = arith.constant 0 : index
    %c0_24 = arith.constant 0 : index
    %c0_25 = arith.constant 0 : index
    %56 = vector.load %arg5[%c0_23, %c0_24, %c0_25] : memref<2x8x1xf32, #tpu.memory_space<vmem>>, vector<1x8x1xf32>
    %57 = vector.shape_cast %56 : vector<1x8x1xf32> to vector<8x1xf32>
    %58 = vector.broadcast %57 : vector<8x1xf32> to vector<8x512xf32>
    %59 = arith.addf %55, %58 : vector<8x512xf32>
    %cst_26 = arith.constant 0.000000e+00 : f32
    %60 = vector.broadcast %cst_26 : f32 to vector<8x512xf32>
    %61 = arith.maximumf %59, %60 : vector<8x512xf32>
    %62 = vector.extract_strided_slice %52 {offsets = [8, 0], sizes = [8, 512], strides = [1, 1]} : vector<16x512xf32> to vector<8x512xf32>
    %63 = arith.addf %61, %62 : vector<8x512xf32>
    %c0_27 = arith.constant 0 : index
    %c0_28 = arith.constant 0 : index
    %c0_29 = arith.constant 0 : index
    %64 = vector.load %arg6[%c0_27, %c0_28, %c0_29] : memref<2x8x1xf32, #tpu.memory_space<vmem>>, vector<1x8x1xf32>
    %65 = vector.shape_cast %64 : vector<1x8x1xf32> to vector<8x1xf32>
    %66 = vector.broadcast %65 : vector<8x1xf32> to vector<8x512xf32>
    %67 = arith.addf %63, %66 : vector<8x512xf32>
    %cst_30 = arith.constant 0.000000e+00 : f32
    %68 = vector.broadcast %cst_30 : f32 to vector<8x512xf32>
    %69 = arith.maximumf %67, %68 : vector<8x512xf32>
    %c17_i32_31 = arith.constant 17 : i32
    %70 = tpu.dynamic_rotate %69 by %c17_i32_31 dim 1 : vector<8x512xf32>, i32 -> vector<8x512xf32>
    %71 = vector.extract_strided_slice %0 {offsets = [0, 0], sizes = [1, 512], strides = [1, 1]} : vector<8x512xf32> to vector<1x512xf32>
    %72 = vector.broadcast %71 : vector<1x512xf32> to vector<8x512xf32>
    %73 = arith.mulf %70, %72 : vector<8x512xf32>
    %c0_32 = arith.constant 0 : index
    %c0_33 = arith.constant 0 : index
    %74 = vector.load %arg8[%c0_32, %c0_33] : memref<72x512xf32, #tpu.memory_space<vmem>>, vector<8x512xf32>
    tpu.vector_store %arg8[%c0_32, %c0_33], %73 {strides = array<i32>} : memref<72x512xf32, #tpu.memory_space<vmem>>, vector<8x512xf32>,
    %c16_i32_34 = arith.constant 16 : i32
    %75 = tpu.dynamic_rotate %69 by %c16_i32_34 dim 1 : vector<8x512xf32>, i32 -> vector<8x512xf32>
    %76 = vector.extract_strided_slice %0 {offsets = [1, 0], sizes = [1, 512], strides = [1, 1]} : vector<8x512xf32> to vector<1x512xf32>
    %77 = vector.broadcast %76 : vector<1x512xf32> to vector<8x512xf32>
    %78 = arith.mulf %75, %77 : vector<8x512xf32>
    %c8_35 = arith.constant 8 : index
    %c0_36 = arith.constant 0 : index
    %79 = vector.load %arg8[%c8_35, %c0_36] : memref<72x512xf32, #tpu.memory_space<vmem>>, vector<8x512xf32>
    tpu.vector_store %arg8[%c8_35, %c0_36], %78 {strides = array<i32>} : memref<72x512xf32, #tpu.memory_space<vmem>>, vector<8x512xf32>,
    %c15_i32_37 = arith.constant 15 : i32
    %80 = tpu.dynamic_rotate %69 by %c15_i32_37 dim 1 : vector<8x512xf32>, i32 -> vector<8x512xf32>
    %81 = vector.extract_strided_slice %0 {offsets = [2, 0], sizes = [1, 512], strides = [1, 1]} : vector<8x512xf32> to vector<1x512xf32>
    %82 = vector.broadcast %81 : vector<1x512xf32> to vector<8x512xf32>
    %83 = arith.mulf %80, %82 : vector<8x512xf32>
    %c16_38 = arith.constant 16 : index
    %c0_39 = arith.constant 0 : index
    %84 = vector.load %arg8[%c16_38, %c0_39] : memref<72x512xf32, #tpu.memory_space<vmem>>, vector<8x512xf32>
    tpu.vector_store %arg8[%c16_38, %c0_39], %83 {strides = array<i32>} : memref<72x512xf32, #tpu.memory_space<vmem>>, vector<8x512xf32>,
    %c1_i32_40 = arith.constant 1 : i32
    %85 = tpu.dynamic_rotate %69 by %c1_i32_40 dim 1 : vector<8x512xf32>, i32 -> vector<8x512xf32>
    %86 = vector.extract_strided_slice %0 {offsets = [3, 0], sizes = [1, 512], strides = [1, 1]} : vector<8x512xf32> to vector<1x512xf32>
    %87 = vector.broadcast %86 : vector<1x512xf32> to vector<8x512xf32>
    %88 = arith.mulf %85, %87 : vector<8x512xf32>
    %c24_41 = arith.constant 24 : index
    %c0_42 = arith.constant 0 : index
    %89 = vector.load %arg8[%c24_41, %c0_42] : memref<72x512xf32, #tpu.memory_space<vmem>>, vector<8x512xf32>
    tpu.vector_store %arg8[%c24_41, %c0_42], %88 {strides = array<i32>} : memref<72x512xf32, #tpu.memory_space<vmem>>, vector<8x512xf32>,
    %c32_43 = arith.constant 32 : index
    %c0_44 = arith.constant 0 : index
    %90 = vector.load %arg8[%c32_43, %c0_44] : memref<72x512xf32, #tpu.memory_space<vmem>>, vector<8x512xf32>
    tpu.vector_store %arg8[%c32_43, %c0_44], %69 {strides = array<i32>} : memref<72x512xf32, #tpu.memory_space<vmem>>, vector<8x512xf32>,
    %c511_i32_45 = arith.constant 511 : i32
    %91 = tpu.dynamic_rotate %69 by %c511_i32_45 dim 1 : vector<8x512xf32>, i32 -> vector<8x512xf32>
    %92 = vector.extract_strided_slice %0 {offsets = [4, 0], sizes = [1, 512], strides = [1, 1]} : vector<8x512xf32> to vector<1x512xf32>
    %93 = vector.broadcast %92 : vector<1x512xf32> to vector<8x512xf32>
    %94 = arith.mulf %91, %93 : vector<8x512xf32>
    %c40_46 = arith.constant 40 : index
    %c0_47 = arith.constant 0 : index
    %95 = vector.load %arg8[%c40_46, %c0_47] : memref<72x512xf32, #tpu.memory_space<vmem>>, vector<8x512xf32>
    tpu.vector_store %arg8[%c40_46, %c0_47], %94 {strides = array<i32>} : memref<72x512xf32, #tpu.memory_space<vmem>>, vector<8x512xf32>,
    %c497_i32_48 = arith.constant 497 : i32
    %96 = tpu.dynamic_rotate %69 by %c497_i32_48 dim 1 : vector<8x512xf32>, i32 -> vector<8x512xf32>
    %97 = vector.extract_strided_slice %0 {offsets = [5, 0], sizes = [1, 512], strides = [1, 1]} : vector<8x512xf32> to vector<1x512xf32>
    %98 = vector.broadcast %97 : vector<1x512xf32> to vector<8x512xf32>
    %99 = arith.mulf %96, %98 : vector<8x512xf32>
    %c48_49 = arith.constant 48 : index
    %c0_50 = arith.constant 0 : index
    %100 = vector.load %arg8[%c48_49, %c0_50] : memref<72x512xf32, #tpu.memory_space<vmem>>, vector<8x512xf32>
    tpu.vector_store %arg8[%c48_49, %c0_50], %99 {strides = array<i32>} : memref<72x512xf32, #tpu.memory_space<vmem>>, vector<8x512xf32>,
    %c496_i32_51 = arith.constant 496 : i32
    %101 = tpu.dynamic_rotate %69 by %c496_i32_51 dim 1 : vector<8x512xf32>, i32 -> vector<8x512xf32>
    %102 = vector.extract_strided_slice %0 {offsets = [6, 0], sizes = [1, 512], strides = [1, 1]} : vector<8x512xf32> to vector<1x512xf32>
    %103 = vector.broadcast %102 : vector<1x512xf32> to vector<8x512xf32>
    %104 = arith.mulf %101, %103 : vector<8x512xf32>
    %c56_52 = arith.constant 56 : index
    %c0_53 = arith.constant 0 : index
    %105 = vector.load %arg8[%c56_52, %c0_53] : memref<72x512xf32, #tpu.memory_space<vmem>>, vector<8x512xf32>
    tpu.vector_store %arg8[%c56_52, %c0_53], %104 {strides = array<i32>} : memref<72x512xf32, #tpu.memory_space<vmem>>, vector<8x512xf32>,
    %c495_i32_54 = arith.constant 495 : i32
    %106 = tpu.dynamic_rotate %69 by %c495_i32_54 dim 1 : vector<8x512xf32>, i32 -> vector<8x512xf32>
    %107 = vector.extract_strided_slice %0 {offsets = [7, 0], sizes = [1, 512], strides = [1, 1]} : vector<8x512xf32> to vector<1x512xf32>
    %108 = vector.broadcast %107 : vector<1x512xf32> to vector<8x512xf32>
    %109 = arith.mulf %106, %108 : vector<8x512xf32>
    %c64_55 = arith.constant 64 : index
    %c0_56 = arith.constant 0 : index
    %110 = vector.load %arg8[%c64_55, %c0_56] : memref<72x512xf32, #tpu.memory_space<vmem>>, vector<8x512xf32>
    tpu.vector_store %arg8[%c64_55, %c0_56], %109 {strides = array<i32>} : memref<72x512xf32, #tpu.memory_space<vmem>>, vector<8x512xf32>,
    %c1 = arith.constant 1 : index
    %c0_57 = arith.constant 0 : index
    %c0_58 = arith.constant 0 : index
    %111 = vector.load %arg3[%c1, %c0_57, %c0_58] : memref<2x16x72xbf16, #tpu.memory_space<vmem>>, vector<1x16x72xbf16>
    %112 = vector.shape_cast %111 : vector<1x16x72xbf16> to vector<16x72xbf16>
    %c0_59 = arith.constant 0 : index
    %c0_60 = arith.constant 0 : index
    %113 = vector.load %arg8[%c0_59, %c0_60] : memref<72x512xf32, #tpu.memory_space<vmem>>, vector<72x512xf32>
    %114 = arith.truncf %113 : vector<72x512xf32> to vector<72x512xbf16>
    %cst_61 = arith.constant dense<0.000000e+00> : vector<16x512xf32>
    %115 = tpu.matmul %112, %114, %cst_61 {dimension_numbers = #tpu.dot_dimension_numbers<[1], [0], [0], [1], [0, 0, 1, 1], [], []>} : vector<16x72xbf16>, vector<72x512xbf16>, vector<16x512xf32> -> vector<16x512xf32>
    %c1_62 = arith.constant 1 : index
    %c0_63 = arith.constant 0 : index
    %c0_64 = arith.constant 0 : index
    %116 = vector.load %arg4[%c1_62, %c0_63, %c0_64] : memref<2x16x1xf32, #tpu.memory_space<vmem>>, vector<1x16x1xf32>
    %117 = vector.shape_cast %116 : vector<1x16x1xf32> to vector<16x1xf32>
    %118 = vector.broadcast %117 : vector<16x1xf32> to vector<16x512xf32>
    %119 = arith.addf %115, %118 : vector<16x512xf32>
    %120 = vector.extract_strided_slice %119 {offsets = [0, 0], sizes = [8, 512], strides = [1, 1]} : vector<16x512xf32> to vector<8x512xf32>
    %cst_65 = arith.constant 0.000000e+00 : f32
    %121 = vector.broadcast %cst_65 : f32 to vector<8x512xf32>
    %122 = arith.maximumf %120, %121 : vector<8x512xf32>
    %c1_66 = arith.constant 1 : index
    %c0_67 = arith.constant 0 : index
    %c0_68 = arith.constant 0 : index
    %123 = vector.load %arg5[%c1_66, %c0_67, %c0_68] : memref<2x8x1xf32, #tpu.memory_space<vmem>>, vector<1x8x1xf32>
    %124 = vector.shape_cast %123 : vector<1x8x1xf32> to vector<8x1xf32>
    %125 = vector.broadcast %124 : vector<8x1xf32> to vector<8x512xf32>
    %126 = arith.addf %122, %125 : vector<8x512xf32>
    %cst_69 = arith.constant 0.000000e+00 : f32
    %127 = vector.broadcast %cst_69 : f32 to vector<8x512xf32>
    %128 = arith.maximumf %126, %127 : vector<8x512xf32>
    %129 = vector.extract_strided_slice %119 {offsets = [8, 0], sizes = [8, 512], strides = [1, 1]} : vector<16x512xf32> to vector<8x512xf32>
    %130 = arith.addf %128, %129 : vector<8x512xf32>
    %c1_70 = arith.constant 1 : index
    %c0_71 = arith.constant 0 : index
    %c0_72 = arith.constant 0 : index
    %131 = vector.load %arg6[%c1_70, %c0_71, %c0_72] : memref<2x8x1xf32, #tpu.memory_space<vmem>>, vector<1x8x1xf32>
    %132 = vector.shape_cast %131 : vector<1x8x1xf32> to vector<8x1xf32>
    %133 = vector.broadcast %132 : vector<8x1xf32> to vector<8x512xf32>
    %134 = arith.addf %130, %133 : vector<8x512xf32>
    %cst_73 = arith.constant 0.000000e+00 : f32
    %135 = vector.broadcast %cst_73 : f32 to vector<8x512xf32>
    %136 = arith.maximumf %134, %135 : vector<8x512xf32>
    %c0_74 = arith.constant 0 : index
    %c0_75 = arith.constant 0 : index
    %c0_76 = arith.constant 0 : index
    %137 = vector.load %arg7[%c0_74, %c0_75, %c0_76] : memref<1x8x512xf32, #tpu.memory_space<vmem>>, vector<1x8x512xf32>
    %138 = vector.shape_cast %137 : vector<1x8x512xf32> to vector<8x512xf32>
    %139 = vector.shape_cast %136 : vector<8x512xf32> to vector<1x8x512xf32>
    tpu.vector_store %arg7[%c0_74, %c0_75, %c0_76], %139 {strides = array<i32>} : memref<1x8x512xf32, #tpu.memory_space<vmem>>, vector<1x8x512xf32>,
    return
  }
  func.func @transform_0(%arg0: i32) -> (i32, i32, i32) {
    %c0_i32 = arith.constant 0 : i32
    %c0_i32_0 = arith.constant 0 : i32
    %c0_i32_1 = arith.constant 0 : i32
    return %arg0, %c0_i32, %c0_i32_0 : i32, i32, i32
  }
  func.func @transform_1(%arg0: i32) -> (i32, i32) {
    %c0_i32 = arith.constant 0 : i32
    %c0_i32_0 = arith.constant 0 : i32
    %c0_i32_1 = arith.constant 0 : i32
    return %c0_i32, %c0_i32_0 : i32, i32
  }
  func.func @transform_2(%arg0: i32) -> (i32, i32, i32) {
    %c0_i32 = arith.constant 0 : i32
    %c0_i32_0 = arith.constant 0 : i32
    %c0_i32_1 = arith.constant 0 : i32
    %c0_i32_2 = arith.constant 0 : i32
    return %c0_i32, %c0_i32_0, %c0_i32_1 : i32, i32, i32
  }
  func.func @transform_3(%arg0: i32) -> (i32, i32, i32) {
    %c0_i32 = arith.constant 0 : i32
    %c0_i32_0 = arith.constant 0 : i32
    %c0_i32_1 = arith.constant 0 : i32
    %c0_i32_2 = arith.constant 0 : i32
    return %c0_i32, %c0_i32_0, %c0_i32_1 : i32, i32, i32
  }
  func.func @transform_4(%arg0: i32) -> (i32, i32, i32) {
    %c0_i32 = arith.constant 0 : i32
    %c0_i32_0 = arith.constant 0 : i32
    %c0_i32_1 = arith.constant 0 : i32
    %c0_i32_2 = arith.constant 0 : i32
    return %c0_i32, %c0_i32_0, %c0_i32_1 : i32, i32, i32
  }
  func.func @transform_5(%arg0: i32) -> (i32, i32, i32) {
    %c0_i32 = arith.constant 0 : i32
    %c0_i32_0 = arith.constant 0 : i32
    %c0_i32_1 = arith.constant 0 : i32
    %c0_i32_2 = arith.constant 0 : i32
    return %c0_i32, %c0_i32_0, %c0_i32_1 : i32, i32, i32
  }
  func.func @transform_6(%arg0: i32) -> (i32, i32, i32) {
    %c0_i32 = arith.constant 0 : i32
    %c0_i32_0 = arith.constant 0 : i32
    %c0_i32_1 = arith.constant 0 : i32
    return %arg0, %c0_i32, %c0_i32_0 : i32, i32, i32
  }
}

</mosaic_0001>

<llo_original>
// kernel: tpu_custom_call.1
$region0: #{tpu_custom_call.1}
  #allocation0 [shape = 'u32[]', space=smem, size = 0x4, offset = 0x4, fixed_abs, tag = 'smem constant byte address 0x4 - core index']
  #allocation1 [shape = 'u32[144,128]{1,0:T(1,128)}', space=vmem, size = 0x12000, scoped, tag = 'internal scratch']
  #allocation2 [shape = 'f32[72,512]{1,0:T(8,128)}', space=vmem, size = 0x24000, scoped, tag = 'scratch operand']
  %s0 = inlined_call_operand.vmem [shape: f32[1,8,512], index: 0, kind: input, shape index: {}]
  %s1 = inlined_call_operand.vmem [shape: f32[8,512], index: 1, kind: input, shape index: {}]
  %s2 = inlined_call_operand.hbm [shape: bf16[2,16,72], index: 2, kind: input, shape index: {}]
  %s3 = inlined_call_operand.vmem [shape: f32[2,16,1], index: 3, kind: input, shape index: {}]
  %s4 = inlined_call_operand.vmem [shape: f32[2,8,1], index: 4, kind: input, shape index: {}]
  %s5 = inlined_call_operand.vmem [shape: f32[2,8,1], index: 5, kind: input, shape index: {}]
  %s6 = inlined_call_operand.hbm [shape: f32[1,8,512], index: 6, kind: output, shape index: {}]
  %s7 = sld [smem:[#allocation0]]
  $region38: #{tpu_custom_call.1} parent=0
    _
  %s9 = ssub.s32 1, %s7
  %s10 = scalar_select 0, %s9, %s7
  $region1: #{tpu_custom_call.1} parent=0
    #allocation3 [shape = 'u8[8192]{0}', space=vmem, size = 0x2000, scoped, tag = 'input window, operand 2, single buffered']
    #allocation4 [shape = 's32[1]{0}', space=sflag, size = 0x4, scoped, tag = 'scoped memory for tpu_custom_call.1']
    #allocation5 [shape = 's32[1]{0}', space=sflag, size = 0x4, scoped, tag = 'scoped memory for tpu_custom_call.1']
    #allocation6 [shape = 'u8[16384]{0}', space=vmem, size = 0x4000, scoped, tag = 'output window, operand 0, single buffered']
    %11 = vsyncpa [#allocation4], 0
    %12 = vsyncpa [#allocation5], 0
    // Predicated region
    $region2: #{tpu_custom_call.1} parent=1 // pred_check
      _
    $region3: #{tpu_custom_call.1} parent=1 // pred_check_branch
      %14 = sbr.rel (0) target = $region5
    $region4: #{tpu_custom_call.1} parent=1 // pred_region
      _
    $region5: #{tpu_custom_call.1} parent=1 // pred_fallthru
      _
    // Predicated region
    $region6: #{tpu_custom_call.1} parent=1 // pred_check
      _
    $region7: #{tpu_custom_call.1} parent=1 // pred_check_branch
      %16 = sbr.rel (0) target = $region9
    $region8: #{tpu_custom_call.1} parent=1 // pred_region
      _
    $region9: #{tpu_custom_call.1} parent=1 // pred_fallthru
      _
    // Predicated region
    $region10: #{tpu_custom_call.1} parent=1 // pred_check
      _
    $region11: #{tpu_custom_call.1} parent=1 // pred_check_branch
      %18 = sbr.rel (0) target = $region13
    $region12: #{tpu_custom_call.1} parent=1 // pred_region
      %s20 = ssub.s32 256, 256
      %21 = vsyncadd [#allocation4], %s20
      %s22 = sshll.u32 [#allocation3], 4
      %s23 = int_to_ptr.vmem [resolvable:$true] %s22
      %28 = dma.hbm_to_vmem [thread:$0]  %s2, 256, %s23, [#allocation4], 64, 64, 4
    $region13: #{tpu_custom_call.1} parent=1 // pred_fallthru
      _
    // Predicated region
    $region14: #{tpu_custom_call.1} parent=1 // pred_check
      _
    $region15: #{tpu_custom_call.1} parent=1 // pred_check_branch
      %30 = sbr.rel (0) target = $region17
    $region16: #{tpu_custom_call.1} parent=1 // pred_region
      _
    $region17: #{tpu_custom_call.1} parent=1 // pred_fallthru
      _
    // Predicated region
    $region18: #{tpu_custom_call.1} parent=1 // pred_check
      _
    $region19: #{tpu_custom_call.1} parent=1 // pred_check_branch
      %32 = sbr.rel (0) target = $region21
    $region20: #{tpu_custom_call.1} parent=1 // pred_region
      _
    $region21: #{tpu_custom_call.1} parent=1 // pred_fallthru
      _
    // Predicated region
    $region22: #{tpu_custom_call.1} parent=1 // pred_check
      _
    $region23: #{tpu_custom_call.1} parent=1 // pred_check_branch
      %34 = sbr.rel (0) target = $region25
    $region24: #{tpu_custom_call.1} parent=1 // pred_region
      _
    $region25: #{tpu_custom_call.1} parent=1 // pred_fallthru
      _
    // Predicated region
    $region26: #{tpu_custom_call.1} parent=1 // pred_check
      _
    $region27: #{tpu_custom_call.1} parent=1 // pred_check_branch
      %36 = sbr.rel (0) target = $region29
    $region28: #{tpu_custom_call.1} parent=1 // pred_region
      %37 = dma.done [#allocation4], 256
    $region29: #{tpu_custom_call.1} parent=1 // pred_fallthru
      _
    %v39 = vld [vmem:[%s1] sm:$0xff]
    %v40 = vld [vmem:[%s1 + $0x8] sm:$0xff]
    %v41 = vld [vmem:[%s1 + $0x10] sm:$0xff]
    %v42 = vld [vmem:[%s1 + $0x18] sm:$0xff]
    %v43 = vld [vmem:[%s0] sm:$0xff]
    %v44 = vld [vmem:[%s0 + $0x8] sm:$0xff]
    %v45 = vld [vmem:[%s0 + $0x10] sm:$0xff]
    %v46 = vld [vmem:[%s0 + $0x18] sm:$0xff]
    %47 = vrot.lane.b32.xlu0 %v43, 17
    %v48 = vpop.permute.xlu0 %47
    %49 = vrot.lane.b32.xlu0 %v44, 17
    %v50 = vpop.permute.xlu0 %49
    %51 = vrot.lane.b32.xlu0 %v45, 17
    %v52 = vpop.permute.xlu0 %51
    %53 = vrot.lane.b32.xlu0 %v46, 17
    %v54 = vpop.permute.xlu0 %53
    %v55 = vlaneseq
    %v56 = vand.u32 %v55, 127
    %vm57 = vcmp.lt.s32.totalorder %v56, 17
    %v58 = vsel %vm57, %v52, %v54
    %v59 = vsel %vm57, %v50, %v52
    %v60 = vsel %vm57, %v48, %v50
    %v61 = vsel %vm57, %v54, %v48
    %v62 = vlaneseq
    %v63 = vshrl.u32 %v62, 7
    %v64 = vsub.s32 0, %v63
    %v65 = vrot.slane %v39, %v64
    %v66 = vlaneseq
    %v67 = vshrl.u32 %v66, 7
    %v68 = vsub.s32 0, %v67
    %v69 = vrot.slane %v40, %v68
    %v70 = vlaneseq
    %v71 = vshrl.u32 %v70, 7
    %v72 = vsub.s32 0, %v71
    %v73 = vrot.slane %v41, %v72
    %v74 = vlaneseq
    %v75 = vshrl.u32 %v74, 7
    %v76 = vsub.s32 0, %v75
    %v77 = vrot.slane %v42, %v76
    %v78 = vmul.f32 %v61, %v65
    %v79 = vmul.f32 %v60, %v69
    %v80 = vmul.f32 %v59, %v73
    %v81 = vmul.f32 %v58, %v77
    %82 = vst [vmem:[#allocation2] sm:$0xff] %v78
    %83 = vst [vmem:[#allocation2 + $0x8] sm:$0xff] %v79
    %84 = vst [vmem:[#allocation2 + $0x10] sm:$0xff] %v80
    %85 = vst [vmem:[#allocation2 + $0x18] sm:$0xff] %v81
    %86 = vrot.lane.b32.xlu0 %v43, 16
    %v87 = vpop.permute.xlu0 %86
    %88 = vrot.lane.b32.xlu0 %v44, 16
    %v89 = vpop.permute.xlu0 %88
    %90 = vrot.lane.b32.xlu0 %v45, 16
    %v91 = vpop.permute.xlu0 %90
    %92 = vrot.lane.b32.xlu0 %v46, 16
    %v93 = vpop.permute.xlu0 %92
    %vm94 = vcmp.lt.s32.totalorder %v56, 16
    %v95 = vsel %vm94, %v91, %v93
    %v96 = vsel %vm94, %v89, %v91
    %v97 = vsel %vm94, %v87, %v89
    %v98 = vsel %vm94, %v93, %v87
    %v99 = vlaneseq
    %v100 = vshrl.u32 %v99, 7
    %v101 = vsub.s32 1, %v100
    %v102 = vrot.slane %v39, %v101
    %v103 = vlaneseq
    %v104 = vshrl.u32 %v103, 7
    %v105 = vsub.s32 1, %v104
    %v106 = vrot.slane %v40, %v105
    %v107 = vlaneseq
    %v108 = vshrl.u32 %v107, 7
    %v109 = vsub.s32 1, %v108
    %v110 = vrot.slane %v41, %v109
    %v111 = vlaneseq
    %v112 = vshrl.u32 %v111, 7
    %v113 = vsub.s32 1, %v112
    %v114 = vrot.slane %v42, %v113
    %v115 = vmul.f32 %v98, %v102
    %v116 = vmul.f32 %v97, %v106
    %v117 = vmul.f32 %v96, %v110
    %v118 = vmul.f32 %v95, %v114
    %119 = vst [vmem:[#allocation2 + $0x20] sm:$0xff] %v115
    %120 = vst [vmem:[#allocation2 + $0x28] sm:$0xff] %v116
    %121 = vst [vmem:[#allocation2 + $0x30] sm:$0xff] %v117
    %122 = vst [vmem:[#allocation2 + $0x38] sm:$0xff] %v118
    %123 = vrot.lane.b32.xlu0 %v43, 15
    %v124 = vpop.permute.xlu0 %123
    %125 = vrot.lane.b32.xlu0 %v44, 15
    %v126 = vpop.permute.xlu0 %125
    %127 = vrot.lane.b32.xlu0 %v45, 15
    %v128 = vpop.permute.xlu0 %127
    %129 = vrot.lane.b32.xlu0 %v46, 15
    %v130 = vpop.permute.xlu0 %129
    %vm131 = vcmp.lt.s32.totalorder %v56, 15
    %v132 = vsel %vm131, %v128, %v130
    %v133 = vsel %vm131, %v126, %v128
    %v134 = vsel %vm131, %v124, %v126
    %v135 = vsel %vm131, %v130, %v124
    %v136 = vlaneseq
    %v137 = vshrl.u32 %v136, 7
    %v138 = vsub.s32 2, %v137
    %v139 = vrot.slane %v39, %v138
    %v140 = vlaneseq
    %v141 = vshrl.u32 %v140, 7
    %v142 = vsub.s32 2, %v141
    %v143 = vrot.slane %v40, %v142
    %v144 = vlaneseq
    %v145 = vshrl.u32 %v144, 7
    %v146 = vsub.s32 2, %v145
    %v147 = vrot.slane %v41, %v146
    %v148 = vlaneseq
    %v149 = vshrl.u32 %v148, 7
    %v150 = vsub.s32 2, %v149
    %v151 = vrot.slane %v42, %v150
    %v152 = vmul.f32 %v135, %v139
    %v153 = vmul.f32 %v134, %v143
    %v154 = vmul.f32 %v133, %v147
    %v155 = vmul.f32 %v132, %v151
    %156 = vst [vmem:[#allocation2 + $0x40] sm:$0xff] %v152
    %157 = vst [vmem:[#allocation2 + $0x48] sm:$0xff] %v153
    %158 = vst [vmem:[#allocation2 + $0x50] sm:$0xff] %v154
    %159 = vst [vmem:[#allocation2 + $0x58] sm:$0xff] %v155
    %160 = vrot.lane.b32.xlu0 %v43, 1
    %v161 = vpop.permute.xlu0 %160
    %162 = vrot.lane.b32.xlu0 %v44, 1
    %v163 = vpop.permute.xlu0 %162
    %164 = vrot.lane.b32.xlu0 %v45, 1
    %v165 = vpop.permute.xlu0 %164
    %166 = vrot.lane.b32.xlu0 %v46, 1
    %v167 = vpop.permute.xlu0 %166
    %vm168 = vcmp.lt.s32.totalorder %v56, 1
    %v169 = vsel %vm168, %v165, %v167
    %v170 = vsel %vm168, %v163, %v165
    %v171 = vsel %vm168, %v161, %v163
    %v172 = vsel %vm168, %v167, %v161
    %v173 = vlaneseq
    %v174 = vshrl.u32 %v173, 7
    %v175 = vsub.s32 3, %v174
    %v176 = vrot.slane %v39, %v175
    %v177 = vlaneseq
    %v178 = vshrl.u32 %v177, 7
    %v179 = vsub.s32 3, %v178
    %v180 = vrot.slane %v40, %v179
    %v181 = vlaneseq
    %v182 = vshrl.u32 %v181, 7
    %v183 = vsub.s32 3, %v182
    %v184 = vrot.slane %v41, %v183
    %v185 = vlaneseq
    %v186 = vshrl.u32 %v185, 7
    %v187 = vsub.s32 3, %v186
    %v188 = vrot.slane %v42, %v187
    %v189 = vmul.f32 %v172, %v176
    %v190 = vmul.f32 %v171, %v180
    %v191 = vmul.f32 %v170, %v184
    %v192 = vmul.f32 %v169, %v188
    %193 = vst [vmem:[#allocation2 + $0x60] sm:$0xff] %v189
    %194 = vst [vmem:[#allocation2 + $0x68] sm:$0xff] %v190
    %195 = vst [vmem:[#allocation2 + $0x70] sm:$0xff] %v191
    %196 = vst [vmem:[#allocation2 + $0x78] sm:$0xff] %v192
    %197 = vst [vmem:[#allocation2 + $0x80] sm:$0xff] %v43
    %198 = vst [vmem:[#allocation2 + $0x88] sm:$0xff] %v44
    %199 = vst [vmem:[#allocation2 + $0x90] sm:$0xff] %v45
    %200 = vst [vmem:[#allocation2 + $0x98] sm:$0xff] %v46
    %201 = vrot.lane.b32.xlu0 %v43, 127
    %v202 = vpop.permute.xlu0 %201
    %203 = vrot.lane.b32.xlu0 %v44, 127
    %v204 = vpop.permute.xlu0 %203
    %205 = vrot.lane.b32.xlu0 %v45, 127
    %v206 = vpop.permute.xlu0 %205
    %207 = vrot.lane.b32.xlu0 %v46, 127
    %v208 = vpop.permute.xlu0 %207
    %vm209 = vcmp.lt.s32.totalorder %v56, 127
    %v210 = vsel %vm209, %v206, %v208
    %v211 = vsel %vm209, %v204, %v206
    %v212 = vsel %vm209, %v202, %v204
    %v213 = vsel %vm209, %v208, %v202
    %v214 = vlaneseq
    %v215 = vshrl.u32 %v214, 7
    %v216 = vsub.s32 4, %v215
    %v217 = vrot.slane %v39, %v216
    %v218 = vlaneseq
    %v219 = vshrl.u32 %v218, 7
    %v220 = vsub.s32 4, %v219
    %v221 = vrot.slane %v40, %v220
    %v222 = vlaneseq
    %v223 = vshrl.u32 %v222, 7
    %v224 = vsub.s32 4, %v223
    %v225 = vrot.slane %v41, %v224
    %v226 = vlaneseq
    %v227 = vshrl.u32 %v226, 7
    %v228 = vsub.s32 4, %v227
    %v229 = vrot.slane %v42, %v228
    %v230 = vmul.f32 %v212, %v217
    %v231 = vmul.f32 %v211, %v221
    %v232 = vmul.f32 %v210, %v225
    %v233 = vmul.f32 %v213, %v229
    %234 = vst [vmem:[#allocation2 + $0xa0] sm:$0xff] %v230
    %235 = vst [vmem:[#allocation2 + $0xa8] sm:$0xff] %v231
    %236 = vst [vmem:[#allocation2 + $0xb0] sm:$0xff] %v232
    %237 = vst [vmem:[#allocation2 + $0xb8] sm:$0xff] %v233
    %238 = vrot.lane.b32.xlu0 %v43, 113
    %v239 = vpop.permute.xlu0 %238
    %240 = vrot.lane.b32.xlu0 %v44, 113
    %v241 = vpop.permute.xlu0 %240
    %242 = vrot.lane.b32.xlu0 %v45, 113
    %v243 = vpop.permute.xlu0 %242
    %244 = vrot.lane.b32.xlu0 %v46, 113
    %v245 = vpop.permute.xlu0 %244
    %vm246 = vcmp.lt.s32.totalorder %v56, 113
    %v247 = vsel %vm246, %v243, %v245
    %v248 = vsel %vm246, %v241, %v243
    %v249 = vsel %vm246, %v239, %v241
    %v250 = vsel %vm246, %v245, %v239
    %v251 = vlaneseq
    %v252 = vshrl.u32 %v251, 7
    %v253 = vsub.s32 5, %v252
    %v254 = vrot.slane %v39, %v253
    %v255 = vlaneseq
    %v256 = vshrl.u32 %v255, 7
    %v257 = vsub.s32 5, %v256
    %v258 = vrot.slane %v40, %v257
    %v259 = vlaneseq
    %v260 = vshrl.u32 %v259, 7
    %v261 = vsub.s32 5, %v260
    %v262 = vrot.slane %v41, %v261
    %v263 = vlaneseq
    %v264 = vshrl.u32 %v263, 7
    %v265 = vsub.s32 5, %v264
    %v266 = vrot.slane %v42, %v265
    %v267 = vmul.f32 %v249, %v254
    %v268 = vmul.f32 %v248, %v258
    %v269 = vmul.f32 %v247, %v262
    %v270 = vmul.f32 %v250, %v266
    %271 = vst [vmem:[#allocation2 + $0xc0] sm:$0xff] %v267
    %272 = vst [vmem:[#allocation2 + $0xc8] sm:$0xff] %v268
    %273 = vst [vmem:[#allocation2 + $0xd0] sm:$0xff] %v269
    %274 = vst [vmem:[#allocation2 + $0xd8] sm:$0xff] %v270
    %275 = vrot.lane.b32.xlu0 %v43, 112
    %v276 = vpop.permute.xlu0 %275
    %277 = vrot.lane.b32.xlu0 %v44, 112
    %v278 = vpop.permute.xlu0 %277
    %279 = vrot.lane.b32.xlu0 %v45, 112
    %v280 = vpop.permute.xlu0 %279
    %281 = vrot.lane.b32.xlu0 %v46, 112
    %v282 = vpop.permute.xlu0 %281
    %vm283 = vcmp.lt.s32.totalorder %v56, 112
    %v284 = vsel %vm283, %v280, %v282
    %v285 = vsel %vm283, %v278, %v280
    %v286 = vsel %vm283, %v276, %v278
    %v287 = vsel %vm283, %v282, %v276
    %v288 = vlaneseq
    %v289 = vshrl.u32 %v288, 7
    %v290 = vsub.s32 6, %v289
    %v291 = vrot.slane %v39, %v290
    %v292 = vlaneseq
    %v293 = vshrl.u32 %v292, 7
    %v294 = vsub.s32 6, %v293
    %v295 = vrot.slane %v40, %v294
    %v296 = vlaneseq
    %v297 = vshrl.u32 %v296, 7
    %v298 = vsub.s32 6, %v297
    %v299 = vrot.slane %v41, %v298
    %v300 = vlaneseq
    %v301 = vshrl.u32 %v300, 7
    %v302 = vsub.s32 6, %v301
    %v303 = vrot.slane %v42, %v302
    %v304 = vmul.f32 %v286, %v291
    %v305 = vmul.f32 %v285, %v295
    %v306 = vmul.f32 %v284, %v299
    %v307 = vmul.f32 %v287, %v303
    %308 = vst [vmem:[#allocation2 + $0xe0] sm:$0xff] %v304
    %309 = vst [vmem:[#allocation2 + $0xe8] sm:$0xff] %v305
    %310 = vst [vmem:[#allocation2 + $0xf0] sm:$0xff] %v306
    %311 = vst [vmem:[#allocation2 + $0xf8] sm:$0xff] %v307
    %312 = vrot.lane.b32.xlu0 %v43, 111
    %v313 = vpop.permute.xlu0 %312
    %314 = vrot.lane.b32.xlu0 %v44, 111
    %v315 = vpop.permute.xlu0 %314
    %316 = vrot.lane.b32.xlu0 %v45, 111
    %v317 = vpop.permute.xlu0 %316
    %318 = vrot.lane.b32.xlu0 %v46, 111
    %v319 = vpop.permute.xlu0 %318
    %vm320 = vcmp.lt.s32.totalorder %v56, 111
    %v321 = vsel %vm320, %v317, %v319
    %v322 = vsel %vm320, %v315, %v317
    %v323 = vsel %vm320, %v313, %v315
    %v324 = vsel %vm320, %v319, %v313
    %v325 = vlaneseq
    %v326 = vshrl.u32 %v325, 7
    %v327 = vsub.s32 7, %v326
    %v328 = vrot.slane %v39, %v327
    %v329 = vlaneseq
    %v330 = vshrl.u32 %v329, 7
    %v331 = vsub.s32 7, %v330
    %v332 = vrot.slane %v40, %v331
    %v333 = vlaneseq
    %v334 = vshrl.u32 %v333, 7
    %v335 = vsub.s32 7, %v334
    %v336 = vrot.slane %v41, %v335
    %v337 = vlaneseq
    %v338 = vshrl.u32 %v337, 7
    %v339 = vsub.s32 7, %v338
    %v340 = vrot.slane %v42, %v339
    %v341 = vmul.f32 %v323, %v328
    %v342 = vmul.f32 %v322, %v332
    %v343 = vmul.f32 %v321, %v336
    %v344 = vmul.f32 %v324, %v340
    %345 = vst [vmem:[#allocation2 + $0x100] sm:$0xff] %v341
    %346 = vst [vmem:[#allocation2 + $0x108] sm:$0xff] %v342
    %347 = vst [vmem:[#allocation2 + $0x110] sm:$0xff] %v343
    %348 = vst [vmem:[#allocation2 + $0x118] sm:$0xff] %v344
    %v349 = vld [vmem:[#allocation3] sm:$0xf]
    %v350 = vld [vmem:[#allocation3 + $0x4] sm:$0xf]
    %v351 = vld [vmem:[#allocation2] sm:$0xff]
    %v352 = vld [vmem:[#allocation2 + $0x8] sm:$0xff]
    %v353 = vld [vmem:[#allocation2 + $0x10] sm:$0xff]
    %v354 = vld [vmem:[#allocation2 + $0x18] sm:$0xff]
    %v355 = vld [vmem:[#allocation2 + $0x20] sm:$0xff]
    %v356 = vld [vmem:[#allocation2 + $0x28] sm:$0xff]
    %v357 = vld [vmem:[#allocation2 + $0x30] sm:$0xff]
    %v358 = vld [vmem:[#allocation2 + $0x38] sm:$0xff]
    %v359 = vld [vmem:[#allocation2 + $0x40] sm:$0xff]
    %v360 = vld [vmem:[#allocation2 + $0x48] sm:$0xff]
    %v361 = vld [vmem:[#allocation2 + $0x50] sm:$0xff]
    %v362 = vld [vmem:[#allocation2 + $0x58] sm:$0xff]
    %v363 = vld [vmem:[#allocation2 + $0x60] sm:$0xff]
    %v364 = vld [vmem:[#allocation2 + $0x68] sm:$0xff]
    %v365 = vld [vmem:[#allocation2 + $0x70] sm:$0xff]
    %v366 = vld [vmem:[#allocation2 + $0x78] sm:$0xff]
    %v367 = vld [vmem:[#allocation2 + $0x80] sm:$0xff]
    %v368 = vld [vmem:[#allocation2 + $0x88] sm:$0xff]
    %v369 = vld [vmem:[#allocation2 + $0x90] sm:$0xff]
    %v370 = vld [vmem:[#allocation2 + $0x98] sm:$0xff]
    %v371 = vld [vmem:[#allocation2 + $0xa0] sm:$0xff]
    %v372 = vld [vmem:[#allocation2 + $0xa8] sm:$0xff]
    %v373 = vld [vmem:[#allocation2 + $0xb0] sm:$0xff]
    %v374 = vld [vmem:[#allocation2 + $0xb8] sm:$0xff]
    %v375 = vld [vmem:[#allocation2 + $0xc0] sm:$0xff]
    %v376 = vld [vmem:[#allocation2 + $0xc8] sm:$0xff]
    %v377 = vld [vmem:[#allocation2 + $0xd0] sm:$0xff]
    %v378 = vld [vmem:[#allocation2 + $0xd8] sm:$0xff]
    %v379 = vld [vmem:[#allocation2 + $0xe0] sm:$0xff]
    %v380 = vld [vmem:[#allocation2 + $0xe8] sm:$0xff]
    %v381 = vld [vmem:[#allocation2 + $0xf0] sm:$0xff]
    %v382 = vld [vmem:[#allocation2 + $0xf8] sm:$0xff]
    %v383 = vld [vmem:[#allocation2 + $0x100] sm:$0xff]
    %v384 = vld [vmem:[#allocation2 + $0x108] sm:$0xff]
    %v385 = vld [vmem:[#allocation2 + $0x110] sm:$0xff]
    %v386 = vld [vmem:[#allocation2 + $0x118] sm:$0xff]
    %v387 = vpack.c.bf16 %v355, %v351
    %v388 = vpack.c.bf16 %v356, %v352
    %v389 = vpack.c.bf16 %v357, %v353
    %v390 = vpack.c.bf16 %v358, %v354
    %v391 = vpack.c.bf16 %v363, %v359
    %v392 = vpack.c.bf16 %v364, %v360
    %v393 = vpack.c.bf16 %v365, %v361
    %v394 = vpack.c.bf16 %v366, %v362
    %v395 = vpack.c.bf16 %v371, %v367
    %v396 = vpack.c.bf16 %v372, %v368
    %v397 = vpack.c.bf16 %v373, %v369
    %v398 = vpack.c.bf16 %v374, %v370
    %v399 = vpack.c.bf16 %v379, %v375
    %v400 = vpack.c.bf16 %v380, %v376
    %v401 = vpack.c.bf16 %v381, %v377
    %v402 = vpack.c.bf16 %v382, %v378
    %v403 = vpack.c.bf16 %v383, %v383
    %v404 = vpack.c.bf16 %v384, %v384
    %v405 = vpack.c.bf16 %v385, %v385
    %v406 = vpack.c.bf16 %v386, %v386
    %v407 = vld [vmem:[%s3] sm:$0xff]
    %v408 = vld [vmem:[%s3 + $0x8] sm:$0xff]
    %410 = vset.pattern.permute.xlu0 0
    %411 = vperm.xlu0 %410, %v407
    %v412 = vpop.permute.xlu0 %411
    %415 = vset.pattern.permute.xlu0 0
    %416 = vperm.xlu0 %415, %v408
    %v417 = vpop.permute.xlu0 %416
    %v421 = vunpack.c.l.b16 %v349
    %v422 = vunpack.c.l.b16 %v350
    %v423 = vpack.c.b16 %v422, %v421
    %vm424 = vcmask 588800
    %v426 = vsel %vm424, %v423, 0
    %vm428 = vcmask 1043456
    %v430 = vsel %vm428, %v403, 0
    %v433 = vsel %vm428, %v404, 0
    %v436 = vsel %vm428, %v405, 0
    %v439 = vsel %vm428, %v406, 0
    %441 = vmatprep.subr.bf16.mxu0 0
    %442 = vmatpush1.bf16.msra.mxu0 0
    %443 = vmatprep.subr.bf16.mxu0 0
    %444 = vmatpush1.bf16.msra.mxu0 0
    %445 = vmatprep.subr.bf16.mxu0 0
    %446 = vmatpush1.bf16.msra.mxu0 0
    %447 = vmatprep.subr.bf16.mxu0 %v433
    %448 = vmatpush1.bf16.msra.mxu0 %v430
    %449 = vmatprep.subr.bf16.mxu0 %v400
    %450 = vmatpush1.bf16.msra.mxu0 %v399
    %451 = vmatprep.subr.bf16.mxu0 %v396
    %452 = vmatpush1.bf16.msra.mxu0 %v395
    %453 = vmatprep.subr.bf16.mxu0 %v392
    %454 = vmatpush1.bf16.msra.mxu0 %v391
    %455 = vmatprep.subr.bf16.mxu0 %v388
    %456 = vmatpush1.bf16.msra.mxu0 %v387
    %457 = vmatprep.subr.bf16.mxu0 0
    %458 = vmatpush2.bf16.msra.mxu0 0
    %459 = vmatprep.subr.bf16.mxu0 0
    %460 = vmatpush2.bf16.msra.mxu0 0
    %461 = vmatprep.subr.bf16.mxu0 0
    %462 = vmatpush2.bf16.msra.mxu0 0
    %463 = vmatprep.subr.bf16.mxu0 0
    %464 = vmatpush2.bf16.msra.mxu0 0
    %465 = vmatprep.subr.bf16.mxu0 0
    %466 = vmatpush2.bf16.msra.mxu0 0
    %467 = vmatprep.subr.bf16.mxu0 0
    %468 = vmatpush2.bf16.msra.mxu0 0
    %469 = vmatprep.subr.bf16.mxu0 0
    %470 = vmatpush2.bf16.msra.mxu0 0
    %471 = vmatprep.subr.bf16.mxu0 0
    %472 = vmatpush2.bf16.msra.mxu0 0
    %473 = vmatprep.mubr.bf16.mxu0 0
    %474 = vmatmul.mubr.bf16.gmra.mxu0 %v426
    %v475 = vpop.f32.mrf.mxu0
    %v476 = vadd.f32 %v412, %v475
    %v477 = vpop.f32.mrf.mxu0
    %v478 = vadd.f32 %v412, %v477
    %v479 = vpop.f32.mrf.mxu0
    %v480 = vadd.f32 %v417, %v479
    %v481 = vpop.f32.mrf.mxu0
    %v482 = vadd.f32 %v417, %v481
    %483 = vdwg.mxu0
    %484 = vmatprep.subr.bf16.mxu0 0
    %485 = vmatpush1.bf16.msra.mxu0 0
    %486 = vmatprep.subr.bf16.mxu0 0
    %487 = vmatpush1.bf16.msra.mxu0 0
    %488 = vmatprep.subr.bf16.mxu0 0
    %489 = vmatpush1.bf16.msra.mxu0 0
    %490 = vmatprep.subr.bf16.mxu0 %v439
    %491 = vmatpush1.bf16.msra.mxu0 %v436
    %492 = vmatprep.subr.bf16.mxu0 %v402
    %493 = vmatpush1.bf16.msra.mxu0 %v401
    %494 = vmatprep.subr.bf16.mxu0 %v398
    %495 = vmatpush1.bf16.msra.mxu0 %v397
    %496 = vmatprep.subr.bf16.mxu0 %v394
    %497 = vmatpush1.bf16.msra.mxu0 %v393
    %498 = vmatprep.subr.bf16.mxu0 %v390
    %499 = vmatpush1.bf16.msra.mxu0 %v389
    %500 = vmatprep.subr.bf16.mxu0 0
    %501 = vmatpush2.bf16.msra.mxu0 0
    %502 = vmatprep.subr.bf16.mxu0 0
    %503 = vmatpush2.bf16.msra.mxu0 0
    %504 = vmatprep.subr.bf16.mxu0 0
    %505 = vmatpush2.bf16.msra.mxu0 0
    %506 = vmatprep.subr.bf16.mxu0 0
    %507 = vmatpush2.bf16.msra.mxu0 0
    %508 = vmatprep.subr.bf16.mxu0 0
    %509 = vmatpush2.bf16.msra.mxu0 0
    %510 = vmatprep.subr.bf16.mxu0 0
    %511 = vmatpush2.bf16.msra.mxu0 0
    %512 = vmatprep.subr.bf16.mxu0 0
    %513 = vmatpush2.bf16.msra.mxu0 0
    %514 = vmatprep.subr.bf16.mxu0 0
    %515 = vmatpush2.bf16.msra.mxu0 0
    %516 = vmatprep.mubr.bf16.mxu0 0
    %517 = vmatmul.mubr.bf16.gmra.mxu0 %v426
    %v518 = vpop.f32.mrf.mxu0
    %v519 = vadd.f32 %v412, %v518
    %v520 = vpop.f32.mrf.mxu0
    %v521 = vadd.f32 %v412, %v520
    %v522 = vpop.f32.mrf.mxu0
    %v523 = vadd.f32 %v417, %v522
    %v524 = vpop.f32.mrf.mxu0
    %v525 = vadd.f32 %v417, %v524
    %526 = vdwg.mxu0
    %v527 = vmax.f32 %v476, 0.0
    %v528 = vmax.f32 %v478, 0.0
    %v529 = vmax.f32 %v519, 0.0
    %v530 = vmax.f32 %v521, 0.0
    %v531 = vld [vmem:[%s4] sm:$0xff]
    %533 = vset.pattern.permute.xlu0 0
    %534 = vperm.xlu0 %533, %v531
    %v535 = vpop.permute.xlu0 %534
    %v537 = vadd.f32 %v527, %v535
    %v538 = vadd.f32 %v528, %v535
    %v539 = vadd.f32 %v529, %v535
    %v540 = vadd.f32 %v530, %v535
    %v541 = vmax.f32 %v537, 0.0
    %v542 = vmax.f32 %v538, 0.0
    %v543 = vmax.f32 %v539, 0.0
    %v544 = vmax.f32 %v540, 0.0
    %v545 = vadd.f32 %v541, %v480
    %v546 = vadd.f32 %v542, %v482
    %v547 = vadd.f32 %v543, %v523
    %v548 = vadd.f32 %v544, %v525
    %v549 = vld [vmem:[%s5] sm:$0xff]
    %551 = vset.pattern.permute.xlu0 0
    %552 = vperm.xlu0 %551, %v549
    %v553 = vpop.permute.xlu0 %552
    %v555 = vadd.f32 %v545, %v553
    %v556 = vadd.f32 %v546, %v553
    %v557 = vadd.f32 %v547, %v553
    %v558 = vadd.f32 %v548, %v553
    %v559 = vmax.f32 %v555, 0.0
    %v560 = vmax.f32 %v556, 0.0
    %v561 = vmax.f32 %v557, 0.0
    %v562 = vmax.f32 %v558, 0.0
    %563 = vrot.lane.b32.xlu0 %v559, 17
    %v564 = vpop.permute.xlu0 %563
    %565 = vrot.lane.b32.xlu0 %v560, 17
    %v566 = vpop.permute.xlu0 %565
    %567 = vrot.lane.b32.xlu0 %v561, 17
    %v568 = vpop.permute.xlu0 %567
    %569 = vrot.lane.b32.xlu0 %v562, 17
    %v570 = vpop.permute.xlu0 %569
    %v571 = vsel %vm57, %v568, %v570
    %v572 = vsel %vm57, %v566, %v568
    %v573 = vsel %vm57, %v564, %v566
    %v574 = vsel %vm57, %v570, %v564
    %v575 = vmul.f32 %v574, %v65
    %v576 = vmul.f32 %v573, %v69
    %v577 = vmul.f32 %v572, %v73
    %v578 = vmul.f32 %v571, %v77
    %579 = vst [vmem:[#allocation2] sm:$0xff] %v575
    %580 = vst [vmem:[#allocation2 + $0x8] sm:$0xff] %v576
    %581 = vst [vmem:[#allocation2 + $0x10] sm:$0xff] %v577
    %582 = vst [vmem:[#allocation2 + $0x18] sm:$0xff] %v578
    %583 = vrot.lane.b32.xlu0 %v559, 16
    %v584 = vpop.permute.xlu0 %583
    %585 = vrot.lane.b32.xlu0 %v560, 16
    %v586 = vpop.permute.xlu0 %585
    %587 = vrot.lane.b32.xlu0 %v561, 16
    %v588 = vpop.permute.xlu0 %587
    %589 = vrot.lane.b32.xlu0 %v562, 16
    %v590 = vpop.permute.xlu0 %589
    %v591 = vsel %vm94, %v588, %v590
    %v592 = vsel %vm94, %v586, %v588
    %v593 = vsel %vm94, %v584, %v586
    %v594 = vsel %vm94, %v590, %v584
    %v595 = vmul.f32 %v594, %v102
    %v596 = vmul.f32 %v593, %v106
    %v597 = vmul.f32 %v592, %v110
    %v598 = vmul.f32 %v591, %v114
    %599 = vst [vmem:[#allocation2 + $0x20] sm:$0xff] %v595
    %600 = vst [vmem:[#allocation2 + $0x28] sm:$0xff] %v596
    %601 = vst [vmem:[#allocation2 + $0x30] sm:$0xff] %v597
    %602 = vst [vmem:[#allocation2 + $0x38] sm:$0xff] %v598
    %603 = vrot.lane.b32.xlu0 %v559, 15
    %v604 = vpop.permute.xlu0 %603
    %605 = vrot.lane.b32.xlu0 %v560, 15
    %v606 = vpop.permute.xlu0 %605
    %607 = vrot.lane.b32.xlu0 %v561, 15
    %v608 = vpop.permute.xlu0 %607
    %609 = vrot.lane.b32.xlu0 %v562, 15
    %v610 = vpop.permute.xlu0 %609
    %v611 = vsel %vm131, %v608, %v610
    %v612 = vsel %vm131, %v606, %v608
    %v613 = vsel %vm131, %v604, %v606
    %v614 = vsel %vm131, %v610, %v604
    %v615 = vmul.f32 %v614, %v139
    %v616 = vmul.f32 %v613, %v143
    %v617 = vmul.f32 %v612, %v147
    %v618 = vmul.f32 %v611, %v151
    %619 = vst [vmem:[#allocation2 + $0x40] sm:$0xff] %v615
    %620 = vst [vmem:[#allocation2 + $0x48] sm:$0xff] %v616
    %621 = vst [vmem:[#allocation2 + $0x50] sm:$0xff] %v617
    %622 = vst [vmem:[#allocation2 + $0x58] sm:$0xff] %v618
    %623 = vrot.lane.b32.xlu0 %v559, 1
    %v624 = vpop.permute.xlu0 %623
    %625 = vrot.lane.b32.xlu0 %v560, 1
    %v626 = vpop.permute.xlu0 %625
    %627 = vrot.lane.b32.xlu0 %v561, 1
    %v628 = vpop.permute.xlu0 %627
    %629 = vrot.lane.b32.xlu0 %v562, 1
    %v630 = vpop.permute.xlu0 %629
    %v631 = vsel %vm168, %v628, %v630
    %v632 = vsel %vm168, %v626, %v628
    %v633 = vsel %vm168, %v624, %v626
    %v634 = vsel %vm168, %v630, %v624
    %v635 = vmul.f32 %v634, %v176
    %v636 = vmul.f32 %v633, %v180
    %v637 = vmul.f32 %v632, %v184
    %v638 = vmul.f32 %v631, %v188
    %639 = vst [vmem:[#allocation2 + $0x60] sm:$0xff] %v635
    %640 = vst [vmem:[#allocation2 + $0x68] sm:$0xff] %v636
    %641 = vst [vmem:[#allocation2 + $0x70] sm:$0xff] %v637
    %642 = vst [vmem:[#allocation2 + $0x78] sm:$0xff] %v638
    %643 = vst [vmem:[#allocation2 + $0x80] sm:$0xff] %v559
    %644 = vst [vmem:[#allocation2 + $0x88] sm:$0xff] %v560
    %645 = vst [vmem:[#allocation2 + $0x90] sm:$0xff] %v561
    %646 = vst [vmem:[#allocation2 + $0x98] sm:$0xff] %v562
    %647 = vrot.lane.b32.xlu0 %v559, 127
    %v648 = vpop.permute.xlu0 %647
    %649 = vrot.lane.b32.xlu0 %v560, 127
    %v650 = vpop.permute.xlu0 %649
    %651 = vrot.lane.b32.xlu0 %v561, 127
    %v652 = vpop.permute.xlu0 %651
    %653 = vrot.lane.b32.xlu0 %v562, 127
    %v654 = vpop.permute.xlu0 %653
    %v655 = vsel %vm209, %v652, %v654
    %v656 = vsel %vm209, %v650, %v652
    %v657 = vsel %vm209, %v648, %v650
    %v658 = vsel %vm209, %v654, %v648
    %v659 = vmul.f32 %v657, %v217
    %v660 = vmul.f32 %v656, %v221
    %v661 = vmul.f32 %v655, %v225
    %v662 = vmul.f32 %v658, %v229
    %663 = vst [vmem:[#allocation2 + $0xa0] sm:$0xff] %v659
    %664 = vst [vmem:[#allocation2 + $0xa8] sm:$0xff] %v660
    %665 = vst [vmem:[#allocation2 + $0xb0] sm:$0xff] %v661
    %666 = vst [vmem:[#allocation2 + $0xb8] sm:$0xff] %v662
    %667 = vrot.lane.b32.xlu0 %v559, 113
    %v668 = vpop.permute.xlu0 %667
    %669 = vrot.lane.b32.xlu0 %v560, 113
    %v670 = vpop.permute.xlu0 %669
    %671 = vrot.lane.b32.xlu0 %v561, 113
    %v672 = vpop.permute.xlu0 %671
    %673 = vrot.lane.b32.xlu0 %v562, 113
    %v674 = vpop.permute.xlu0 %673
    %v675 = vsel %vm246, %v672, %v674
    %v676 = vsel %vm246, %v670, %v672
    %v677 = vsel %vm246, %v668, %v670
    %v678 = vsel %vm246, %v674, %v668
    %v679 = vmul.f32 %v677, %v254
    %v680 = vmul.f32 %v676, %v258
    %v681 = vmul.f32 %v675, %v262
    %v682 = vmul.f32 %v678, %v266
    %683 = vst [vmem:[#allocation2 + $0xc0] sm:$0xff] %v679
    %684 = vst [vmem:[#allocation2 + $0xc8] sm:$0xff] %v680
    %685 = vst [vmem:[#allocation2 + $0xd0] sm:$0xff] %v681
    %686 = vst [vmem:[#allocation2 + $0xd8] sm:$0xff] %v682
    %687 = vrot.lane.b32.xlu0 %v559, 112
    %v688 = vpop.permute.xlu0 %687
    %689 = vrot.lane.b32.xlu0 %v560, 112
    %v690 = vpop.permute.xlu0 %689
    %691 = vrot.lane.b32.xlu0 %v561, 112
    %v692 = vpop.permute.xlu0 %691
    %693 = vrot.lane.b32.xlu0 %v562, 112
    %v694 = vpop.permute.xlu0 %693
    %v695 = vsel %vm283, %v692, %v694
    %v696 = vsel %vm283, %v690, %v692
    %v697 = vsel %vm283, %v688, %v690
    %v698 = vsel %vm283, %v694, %v688
    %v699 = vmul.f32 %v697, %v291
    %v700 = vmul.f32 %v696, %v295
    %v701 = vmul.f32 %v695, %v299
    %v702 = vmul.f32 %v698, %v303
    %703 = vst [vmem:[#allocation2 + $0xe0] sm:$0xff] %v699
    %704 = vst [vmem:[#allocation2 + $0xe8] sm:$0xff] %v700
    %705 = vst [vmem:[#allocation2 + $0xf0] sm:$0xff] %v701
    %706 = vst [vmem:[#allocation2 + $0xf8] sm:$0xff] %v702
    %707 = vrot.lane.b32.xlu0 %v559, 111
    %v708 = vpop.permute.xlu0 %707
    %709 = vrot.lane.b32.xlu0 %v560, 111
    %v710 = vpop.permute.xlu0 %709
    %711 = vrot.lane.b32.xlu0 %v561, 111
    %v712 = vpop.permute.xlu0 %711
    %713 = vrot.lane.b32.xlu0 %v562, 111
    %v714 = vpop.permute.xlu0 %713
    %v715 = vsel %vm320, %v712, %v714
    %v716 = vsel %vm320, %v710, %v712
    %v717 = vsel %vm320, %v708, %v710
    %v718 = vsel %vm320, %v714, %v708
    %v719 = vmul.f32 %v717, %v328
    %v720 = vmul.f32 %v716, %v332
    %v721 = vmul.f32 %v715, %v336
    %v722 = vmul.f32 %v718, %v340
    %723 = vst [vmem:[#allocation2 + $0x100] sm:$0xff] %v719
    %724 = vst [vmem:[#allocation2 + $0x108] sm:$0xff] %v720
    %725 = vst [vmem:[#allocation2 + $0x110] sm:$0xff] %v721
    %726 = vst [vmem:[#allocation2 + $0x118] sm:$0xff] %v722
    %s727 = scalar_lea.vmem [#allocation3], 8
    %v728 = vld [vmem:[%s727] sm:$0xf]
    %v729 = vld [vmem:[%s727 + $0x4] sm:$0xf]
    %v730 = vld [vmem:[#allocation2] sm:$0xff]
    %v731 = vld [vmem:[#allocation2 + $0x8] sm:$0xff]
    %v732 = vld [vmem:[#allocation2 + $0x10] sm:$0xff]
    %v733 = vld [vmem:[#allocation2 + $0x18] sm:$0xff]
    %v734 = vld [vmem:[#allocation2 + $0x20] sm:$0xff]
    %v735 = vld [vmem:[#allocation2 + $0x28] sm:$0xff]
    %v736 = vld [vmem:[#allocation2 + $0x30] sm:$0xff]
    %v737 = vld [vmem:[#allocation2 + $0x38] sm:$0xff]
    %v738 = vld [vmem:[#allocation2 + $0x40] sm:$0xff]
    %v739 = vld [vmem:[#allocation2 + $0x48] sm:$0xff]
    %v740 = vld [vmem:[#allocation2 + $0x50] sm:$0xff]
    %v741 = vld [vmem:[#allocation2 + $0x58] sm:$0xff]
    %v742 = vld [vmem:[#allocation2 + $0x60] sm:$0xff]
    %v743 = vld [vmem:[#allocation2 + $0x68] sm:$0xff]
    %v744 = vld [vmem:[#allocation2 + $0x70] sm:$0xff]
    %v745 = vld [vmem:[#allocation2 + $0x78] sm:$0xff]
    %v746 = vld [vmem:[#allocation2 + $0x80] sm:$0xff]
    %v747 = vld [vmem:[#allocation2 + $0x88] sm:$0xff]
    %v748 = vld [vmem:[#allocation2 + $0x90] sm:$0xff]
    %v749 = vld [vmem:[#allocation2 + $0x98] sm:$0xff]
    %v750 = vld [vmem:[#allocation2 + $0xa0] sm:$0xff]
    %v751 = vld [vmem:[#allocation2 + $0xa8] sm:$0xff]
    %v752 = vld [vmem:[#allocation2 + $0xb0] sm:$0xff]
    %v753 = vld [vmem:[#allocation2 + $0xb8] sm:$0xff]
    %v754 = vld [vmem:[#allocation2 + $0xc0] sm:$0xff]
    %v755 = vld [vmem:[#allocation2 + $0xc8] sm:$0xff]
    %v756 = vld [vmem:[#allocation2 + $0xd0] sm:$0xff]
    %v757 = vld [vmem:[#allocation2 + $0xd8] sm:$0xff]
    %v758 = vld [vmem:[#allocation2 + $0xe0] sm:$0xff]
    %v759 = vld [vmem:[#allocation2 + $0xe8] sm:$0xff]
    %v760 = vld [vmem:[#allocation2 + $0xf0] sm:$0xff]
    %v761 = vld [vmem:[#allocation2 + $0xf8] sm:$0xff]
    %v762 = vld [vmem:[#allocation2 + $0x100] sm:$0xff]
    %v763 = vld [vmem:[#allocation2 + $0x108] sm:$0xff]
    %v764 = vld [vmem:[#allocation2 + $0x110] sm:$0xff]
    %v765 = vld [vmem:[#allocation2 + $0x118] sm:$0xff]
    %v766 = vpack.c.bf16 %v734, %v730
    %v767 = vpack.c.bf16 %v735, %v731
    %v768 = vpack.c.bf16 %v736, %v732
    %v769 = vpack.c.bf16 %v737, %v733
    %v770 = vpack.c.bf16 %v742, %v738
    %v771 = vpack.c.bf16 %v743, %v739
    %v772 = vpack.c.bf16 %v744, %v740
    %v773 = vpack.c.bf16 %v745, %v741
    %v774 = vpack.c.bf16 %v750, %v746
    %v775 = vpack.c.bf16 %v751, %v747
    %v776 = vpack.c.bf16 %v752, %v748
    %v777 = vpack.c.bf16 %v753, %v749
    %v778 = vpack.c.bf16 %v758, %v754
    %v779 = vpack.c.bf16 %v759, %v755
    %v780 = vpack.c.bf16 %v760, %v756
    %v781 = vpack.c.bf16 %v761, %v757
    %v782 = vpack.c.bf16 %v762, %v762
    %v783 = vpack.c.bf16 %v763, %v763
    %v784 = vpack.c.bf16 %v764, %v764
    %v785 = vpack.c.bf16 %v765, %v765
    %s786 = scalar_lea.vmem %s3, 16
    %v787 = vld [vmem:[%s786] sm:$0xff]
    %v788 = vld [vmem:[%s786 + $0x8] sm:$0xff]
    %790 = vset.pattern.permute.xlu0 0
    %791 = vperm.xlu0 %790, %v787
    %v792 = vpop.permute.xlu0 %791
    %795 = vset.pattern.permute.xlu0 0
    %796 = vperm.xlu0 %795, %v788
    %v797 = vpop.permute.xlu0 %796
    %v801 = vunpack.c.l.b16 %v728
    %v802 = vunpack.c.l.b16 %v729
    %v803 = vpack.c.b16 %v802, %v801
    %v805 = vsel %vm424, %v803, 0
    %v808 = vsel %vm428, %v782, 0
    %v811 = vsel %vm428, %v783, 0
    %v814 = vsel %vm428, %v784, 0
    %v817 = vsel %vm428, %v785, 0
    %819 = vmatprep.subr.bf16.mxu0 0
    %820 = vmatpush1.bf16.msra.mxu0 0
    %821 = vmatprep.subr.bf16.mxu0 0
    %822 = vmatpush1.bf16.msra.mxu0 0
    %823 = vmatprep.subr.bf16.mxu0 0
    %824 = vmatpush1.bf16.msra.mxu0 0
    %825 = vmatprep.subr.bf16.mxu0 %v811
    %826 = vmatpush1.bf16.msra.mxu0 %v808
    %827 = vmatprep.subr.bf16.mxu0 %v779
    %828 = vmatpush1.bf16.msra.mxu0 %v778
    %829 = vmatprep.subr.bf16.mxu0 %v775
    %830 = vmatpush1.bf16.msra.mxu0 %v774
    %831 = vmatprep.subr.bf16.mxu0 %v771
    %832 = vmatpush1.bf16.msra.mxu0 %v770
    %833 = vmatprep.subr.bf16.mxu0 %v767
    %834 = vmatpush1.bf16.msra.mxu0 %v766
    %835 = vmatprep.subr.bf16.mxu0 0
    %836 = vmatpush2.bf16.msra.mxu0 0
    %837 = vmatprep.subr.bf16.mxu0 0
    %838 = vmatpush2.bf16.msra.mxu0 0
    %839 = vmatprep.subr.bf16.mxu0 0
    %840 = vmatpush2.bf16.msra.mxu0 0
    %841 = vmatprep.subr.bf16.mxu0 0
    %842 = vmatpush2.bf16.msra.mxu0 0
    %843 = vmatprep.subr.bf16.mxu0 0
    %844 = vmatpush2.bf16.msra.mxu0 0
    %845 = vmatprep.subr.bf16.mxu0 0
    %846 = vmatpush2.bf16.msra.mxu0 0
    %847 = vmatprep.subr.bf16.mxu0 0
    %848 = vmatpush2.bf16.msra.mxu0 0
    %849 = vmatprep.subr.bf16.mxu0 0
    %850 = vmatpush2.bf16.msra.mxu0 0
    %851 = vmatprep.mubr.bf16.mxu0 0
    %852 = vmatmul.mubr.bf16.gmra.mxu0 %v805
    %v853 = vpop.f32.mrf.mxu0
    %v854 = vadd.f32 %v792, %v853
    %v855 = vpop.f32.mrf.mxu0
    %v856 = vadd.f32 %v792, %v855
    %v857 = vpop.f32.mrf.mxu0
    %v858 = vadd.f32 %v797, %v857
    %v859 = vpop.f32.mrf.mxu0
    %v860 = vadd.f32 %v797, %v859
    %861 = vdwg.mxu0
    %862 = vmatprep.subr.bf16.mxu0 0
    %863 = vmatpush1.bf16.msra.mxu0 0
    %864 = vmatprep.subr.bf16.mxu0 0
    %865 = vmatpush1.bf16.msra.mxu0 0
    %866 = vmatprep.subr.bf16.mxu0 0
    %867 = vmatpush1.bf16.msra.mxu0 0
    %868 = vmatprep.subr.bf16.mxu0 %v817
    %869 = vmatpush1.bf16.msra.mxu0 %v814
    %870 = vmatprep.subr.bf16.mxu0 %v781
    %871 = vmatpush1.bf16.msra.mxu0 %v780
    %872 = vmatprep.subr.bf16.mxu0 %v777
    %873 = vmatpush1.bf16.msra.mxu0 %v776
    %874 = vmatprep.subr.bf16.mxu0 %v773
    %875 = vmatpush1.bf16.msra.mxu0 %v772
    %876 = vmatprep.subr.bf16.mxu0 %v769
    %877 = vmatpush1.bf16.msra.mxu0 %v768
    %878 = vmatprep.subr.bf16.mxu0 0
    %879 = vmatpush2.bf16.msra.mxu0 0
    %880 = vmatprep.subr.bf16.mxu0 0
    %881 = vmatpush2.bf16.msra.mxu0 0
    %882 = vmatprep.subr.bf16.mxu0 0
    %883 = vmatpush2.bf16.msra.mxu0 0
    %884 = vmatprep.subr.bf16.mxu0 0
    %885 = vmatpush2.bf16.msra.mxu0 0
    %886 = vmatprep.subr.bf16.mxu0 0
    %887 = vmatpush2.bf16.msra.mxu0 0
    %888 = vmatprep.subr.bf16.mxu0 0
    %889 = vmatpush2.bf16.msra.mxu0 0
    %890 = vmatprep.subr.bf16.mxu0 0
    %891 = vmatpush2.bf16.msra.mxu0 0
    %892 = vmatprep.subr.bf16.mxu0 0
    %893 = vmatpush2.bf16.msra.mxu0 0
    %894 = vmatprep.mubr.bf16.mxu0 0
    %895 = vmatmul.mubr.bf16.gmra.mxu0 %v805
    %v896 = vpop.f32.mrf.mxu0
    %v897 = vadd.f32 %v792, %v896
    %v898 = vpop.f32.mrf.mxu0
    %v899 = vadd.f32 %v792, %v898
    %v900 = vpop.f32.mrf.mxu0
    %v901 = vadd.f32 %v797, %v900
    %v902 = vpop.f32.mrf.mxu0
    %v903 = vadd.f32 %v797, %v902
    %904 = vdwg.mxu0
    %v905 = vmax.f32 %v854, 0.0
    %v906 = vmax.f32 %v856, 0.0
    %v907 = vmax.f32 %v897, 0.0
    %v908 = vmax.f32 %v899, 0.0
    %s909 = scalar_lea.vmem %s4, 8
    %v910 = vld [vmem:[%s909] sm:$0xff]
    %912 = vset.pattern.permute.xlu0 0
    %913 = vperm.xlu0 %912, %v910
    %v914 = vpop.permute.xlu0 %913
    %v916 = vadd.f32 %v905, %v914
    %v917 = vadd.f32 %v906, %v914
    %v918 = vadd.f32 %v907, %v914
    %v919 = vadd.f32 %v908, %v914
    %v920 = vmax.f32 %v916, 0.0
    %v921 = vmax.f32 %v917, 0.0
    %v922 = vmax.f32 %v918, 0.0
    %v923 = vmax.f32 %v919, 0.0
    %v924 = vadd.f32 %v920, %v858
    %v925 = vadd.f32 %v921, %v860
    %v926 = vadd.f32 %v922, %v901
    %v927 = vadd.f32 %v923, %v903
    %s928 = scalar_lea.vmem %s5, 8
    %v929 = vld [vmem:[%s928] sm:$0xff]
    %931 = vset.pattern.permute.xlu0 0
    %932 = vperm.xlu0 %931, %v929
    %v933 = vpop.permute.xlu0 %932
    %v935 = vadd.f32 %v924, %v933
    %v936 = vadd.f32 %v925, %v933
    %v937 = vadd.f32 %v926, %v933
    %v938 = vadd.f32 %v927, %v933
    %v939 = vmax.f32 %v935, 0.0
    %v940 = vmax.f32 %v936, 0.0
    %v941 = vmax.f32 %v937, 0.0
    %v942 = vmax.f32 %v938, 0.0
    %943 = vst [vmem:[#allocation6] sm:$0xff] %v939
    %944 = vst [vmem:[#allocation6 + $0x8] sm:$0xff] %v940
    %945 = vst [vmem:[#allocation6 + $0x10] sm:$0xff] %v941
    %946 = vst [vmem:[#allocation6 + $0x18] sm:$0xff] %v942
    // Predicated region
    $region30: #{tpu_custom_call.1} parent=1 // pred_check
      _
    $region31: #{tpu_custom_call.1} parent=1 // pred_check_branch
      %948 = sbr.rel (0) target = $region33
    $region32: #{tpu_custom_call.1} parent=1 // pred_region
      %s950 = ssub.s32 512, 512
      %951 = vsyncadd [#allocation5], %s950
      %s953 = sshll.u32 [#allocation6], 4
      %s954 = int_to_ptr.vmem [resolvable:$true] %s953
      %956 = dma.vmem_to_hbm [thread:$0]  %s954, 512, %s6, [#allocation5]
    $region33: #{tpu_custom_call.1} parent=1 // pred_fallthru
      _
    // Predicated region
    $region34: #{tpu_custom_call.1} parent=1 // pred_check
      _
    $region35: #{tpu_custom_call.1} parent=1 // pred_check_branch
      %958 = sbr.rel (0) target = $region37
    $region36: #{tpu_custom_call.1} parent=1 // pred_region
      %959 = dma.done [#allocation5], 512
    $region37: #{tpu_custom_call.1} parent=1 // pred_fallthru
      _
    %960 = vsyncpa [#allocation4], 1
    %961 = vsyncpa [#allocation5], 1

</llo_original>
